<compile_context>
chip_gen: v5e
topology: v5e:2x2
jax: 0.10.0
libtpu: 0.0.40
codegen_flags: <defaults>
</compile_context>

<pallas_src>
import functools

import jax
import jax.numpy as jnp
from jax import lax
from jax.experimental import pallas as pl
from jax.experimental.pallas import tpu as pltpu

BN_EPS = 1e-5              # nn.BatchNorm1d default eps
NORM_EPS = 1e-12           # F.normalize default eps
VMEM_BUDGET = 40 * 1024 * 1024   # tile-sizing budget (fits v7x's 64 MiB/core)
VMEM_LIMIT = 48 * 1024 * 1024    # scoped-vmem limit handed to Mosaic


def _folded_bn(h, gamma, beta, inv_b):
    """Training-mode BatchNorm over [B, tn], centered two-pass variance."""
    mu = jnp.sum(h, axis=0, keepdims=True) * inv_b           # [1, tn]
    d = h - mu
    var = jnp.sum(d * d, axis=0, keepdims=True) * inv_b      # biased batch var
    return d * (gamma * lax.rsqrt(var + BN_EPS)) + beta


def _layer0_kernel(xr_ref, w_ref, g_ref, b_ref, a_ref, *, inv_b):
    """a[:, tile] = relu(bn0(relu(x) @ w0[:, tile])); relu(x) precomputed,
    result stored in the weight dtype (layer-1 input ReLU is fused here)."""
    j = pl.program_id(0)
    h = jnp.dot(xr_ref[...], w_ref[...], preferred_element_type=jnp.float32)
    h = _folded_bn(h, g_ref[j], b_ref[j], inv_b)              # g_ref[j]: [1, tile_n]
    a_ref[...] = jnp.maximum(h, 0.0).astype(a_ref.dtype)


def _layer1_kernel(a_ref, t_ref, w_ref, g_ref, b_ref,
                   dot_ref, pss_ref, tss_ref, *, inv_b, n_inner):
    """pred[:, tile] = bn1(a @ w1[:, tile]); accumulate per-row cosine-loss
    partials into per-outer-index (per-core on megacore) output blocks."""
    c = pl.program_id(0)   # "parallel": split across TensorCores on megacore
    j = pl.program_id(1)   # "arbitrary": this core's reduction over its tiles

    @pl.when(j == 0)
    def _init():
        dot_ref[...] = jnp.zeros_like(dot_ref)
        pss_ref[...] = jnp.zeros_like(pss_ref)
        tss_ref[...] = jnp.zeros_like(tss_ref)

    col = c * n_inner + j
    h = jnp.dot(a_ref[...], w_ref[...], preferred_element_type=jnp.float32)
    pred = _folded_bn(h, g_ref[col], b_ref[col], inv_b)
    tgt = t_ref[...].astype(jnp.float32)

    dot_ref[...] += jnp.sum(pred * tgt, axis=1, keepdims=True)    # [B, 1]
    pss_ref[...] += jnp.sum(pred * pred, axis=1, keepdims=True)
    tss_ref[...] += jnp.sum(tgt * tgt, axis=1, keepdims=True)


def _choose_tile_n(B, D, w_bytes):
    """Largest column tile whose working set fits the per-core VMEM budget."""
    # Whole-resident: relu(x) / a in weight dtype + reshaped BN gamma/beta
    # (sublane-padded to 8 rows per column tile).
    resident = B * D * w_bytes + 2 * 8 * D * 4
    candidates = [t for t in (1024, 512, 256, 128) if D % t == 0] or [D]
    for t in candidates:
        per_step = 2 * D * t * w_bytes          # weight tile, double-buffered
        per_step += 2 * B * t * 4               # layer-1 target tile, double-buffered
        per_step += 2 * B * t * w_bytes         # layer-0 output tile, double-buffered
        if resident + per_step <= VMEM_BUDGET:
            return t
    return candidates[-1]


def cl_head_forward(x, target, params, *, tile_n=None):
    """CLHead.forward. x, target: [B, D] float32.

    params: w0/w1 are [D, D] (f32 or bf16, transposed vs torch Linear),
    g0/be0/g1/be1 are [1, D] f32. Linear biases (b0/b1) may be present but are
    unused (cancelled exactly by training-mode BN). bf16 weights are the
    recommended (and on v5e effectively mandatory) configuration.
    """
    B, D = x.shape
    assert target.shape == (B, D)
    w0, w1 = params["w0"], params["w1"]
    w_dtype = w0.dtype
    assert w1.dtype == w_dtype
    w_bytes = jnp.dtype(w_dtype).itemsize

    if tile_n is None:
        tile_n = _choose_tile_n(B, D, w_bytes)
    tile_n = min(tile_n, D)
    assert D % tile_n == 0, "embed_size must divide evenly into tile_n columns"
    n_tiles = D // tile_n
    # Megacore (v7x): split layer-1's reduction into 2 per-core partial sums.
    n_par = 2 if n_tiles % 2 == 0 else 1
    n_inner = n_tiles // n_par
    inv_b = 1.0 / B

    # Whole array placed in VMEM once (single-buffered, no per-step DMA).
    resident = pl.BlockSpec(memory_space=pltpu.MemorySpace.VMEM)

    # BN params reshaped to [n_tiles, 1, tile_n] so the kernel selects the
    # current column tile with a dynamic leading-dim index (no per-step DMA).
    g0 = params["g0"].reshape(n_tiles, 1, tile_n)
    be0 = params["be0"].reshape(n_tiles, 1, tile_n)
    g1 = params["g1"].reshape(n_tiles, 1, tile_n)
    be1 = params["be1"].reshape(n_tiles, 1, tile_n)

    # Hoisted loop-invariant: relu(x), cast once to the MXU operand dtype
    # (also halves the x DMA + resident VMEM when weights are bf16).
    xr = jnp.maximum(x, 0.0).astype(w_dtype)

    # ---- layer 0: a = relu(bn0(fc0(relu(x)))), independent feature tiles ----
    a = pl.pallas_call(
        functools.partial(_layer0_kernel, inv_b=inv_b),
        grid=(n_tiles,),
        in_specs=[
            resident,                                     # relu(x), w-dtype, resident
            pl.BlockSpec((D, tile_n), lambda j: (0, j)),  # w0 column tile (dbl-buffered)
            resident,                                     # bn0 gamma [n_tiles,1,tile_n]
            resident,                                     # bn0 beta
        ],
        out_specs=pl.BlockSpec((B, tile_n), lambda j: (0, j)),
        out_shape=jax.ShapeDtypeStruct((B, D), w_dtype),  # `a` stored in weight dtype
        compiler_params=pltpu.CompilerParams(
            dimension_semantics=("parallel",),
            vmem_limit_bytes=VMEM_LIMIT),
    )(xr, w0, g0, be0)

    # ---- layer 1 + cosine-loss partials (outer axis: megacore split) ----
    col_map = lambda c, j: (0, c * n_inner + j)
    part_spec = pl.BlockSpec((None, B, 1), lambda c, j: (c, 0, 0))
    dot_p, pss_p, tss_p = pl.pallas_call(
        functools.partial(_layer1_kernel, inv_b=inv_b, n_inner=n_inner),
        grid=(n_par, n_inner),
        in_specs=[
            resident,                                     # a (resident, w-dtype)
            pl.BlockSpec((B, tile_n), col_map),           # target column tile
            pl.BlockSpec((D, tile_n), col_map),           # w1 column tile (dbl-buffered)
            resident,                                     # bn1 gamma
            resident,                                     # bn1 beta
        ],
        out_specs=(part_spec, part_spec, part_spec),
        out_shape=(jax.ShapeDtypeStruct((n_par, B, 1), jnp.float32),) * 3,
        compiler_params=pltpu.CompilerParams(
            dimension_semantics=("parallel", "arbitrary"),
            vmem_limit_bytes=VMEM_LIMIT),
    )(a, target, w1, g1, be1)

    # Tiny cross-core combine: full per-row sums -> normalized cosine loss.
    dot = jnp.sum(dot_p, axis=0)          # [B, 1]
    pss = jnp.sum(pss_p, axis=0)
    tss = jnp.sum(tss_p, axis=0)
    eps2 = jnp.float32(NORM_EPS * NORM_EPS)
    inv_p = lax.rsqrt(jnp.maximum(pss, eps2))   # 1 / max(||pred||, eps)
    inv_t = lax.rsqrt(jnp.maximum(tss, eps2))   # 1 / max(||tgt||, eps)
    return (-2.0 * inv_b) * jnp.sum(dot * inv_p * inv_t)


def make_params(key, embed_size, weight_dtype=jnp.float32):
    """Synthetic CLNeck(1, D, num_layer=2) parameters (non-trivial BN state)."""
    d = embed_size
    k0, k1, k2, k3, k4, k5, k6, k7 = jax.random.split(key, 8)
    scale = 1.0 / jnp.sqrt(d)
    lin_w = lambda k: (jax.random.uniform(k, (d, d), jnp.float32, -1, 1)
                       * scale).astype(weight_dtype)
    lin_b = lambda k: jax.random.uniform(k, (1, d), jnp.float32, -1, 1) * scale
    return {
        "w0": lin_w(k0), "b0": lin_b(k1),
        "g0": 1.0 + 0.1 * jax.random.normal(k2, (1, d), jnp.float32),
        "be0": 0.2 * jax.random.normal(k3, (1, d), jnp.float32),
        "w1": lin_w(k4), "b1": lin_b(k5),
        "g1": 1.0 + 0.1 * jax.random.normal(k6, (1, d), jnp.float32),
        "be1": 0.2 * jax.random.normal(k7, (1, d), jnp.float32),
    }


def reference_forward(x, target, params, matmul_dtype=jnp.float32):
    """Pure-JAX, faithful CLHead.forward (with biases, two-pass training BN).

    matmul_dtype emulates the kernel's MXU operand dtype (f32 or bf16)."""
    precision = (jax.lax.Precision.HIGHEST
                 if matmul_dtype == jnp.float32 else None)

    def fc(h, w, b):
        h = jnp.maximum(h, 0.0).astype(matmul_dtype)
        return jnp.dot(h, w.astype(matmul_dtype),
                       preferred_element_type=jnp.float32,
                       precision=precision) + b

    def bn(h, g, be):
        mu = h.mean(0, keepdims=True)
        var = ((h - mu) ** 2).mean(0, keepdims=True)
        return (h - mu) / jnp.sqrt(var + BN_EPS) * g + be

    h = bn(fc(x, params["w0"], params["b0"]), params["g0"], params["be0"])
    h = bn(fc(h, params["w1"], params["b1"]), params["g1"], params["be1"])
    pn = h / jnp.maximum(jnp.linalg.norm(h, axis=1, keepdims=True), NORM_EPS)
    tn = target / jnp.maximum(jnp.linalg.norm(target, axis=1, keepdims=True), NORM_EPS)
    return -2.0 * jnp.sum(pn * tn) / x.shape[0]


if __name__ == "__main__":
    # Small lane-dense shapes: B multiple of 8 (sublanes), D multiple of 128
    # (lanes). tile_n=128 with D=512 exercises the full tiled path: layer-0
    # grid of 4 "parallel" tiles; layer-1 grid (2, 2) = outer megacore-style
    # split x in-core accumulation over 2 feature tiles.
    B, D = 8, 512
    key = jax.random.PRNGKey(0)
    kx, kt, kp = jax.random.split(key, 3)
    x = jax.random.normal(kx, (B, D), jnp.float32)
    target = jax.random.normal(kt, (B, D), jnp.float32)

    params_f32 = make_params(kp, D, weight_dtype=jnp.float32)
    params_bf16 = {k: (v.astype(jnp.bfloat16) if k in ("w0", "w1") else v)
                   for k, v in params_f32.items()}

    ref_bf16 = reference_forward(x, target, params_f32, matmul_dtype=jnp.bfloat16)
    ref_f32 = reference_forward(x, target, params_f32, matmul_dtype=jnp.float32)

    # --- bf16 weights (recommended config); small explicit tile to hit the
    #     multi-tile / outer-split code paths at this toy size ---
    fwd_tiled = jax.jit(functools.partial(cl_head_forward, tile_n=128))
    loss_bf16 = fwd_tiled(x, target, params_bf16)
    jax.block_until_ready(loss_bf16)
    # Tight check vs a reference using the same bf16 MXU operands.
    assert jnp.allclose(loss_bf16, ref_bf16, rtol=2e-3, atol=1e-3), (loss_bf16, ref_bf16)
    # Sanity check vs the exact f32 module semantics.
    assert jnp.allclose(loss_bf16, ref_f32, rtol=3e-2, atol=3e-2), (loss_bf16, ref_f32)

    # --- f32 weights, auto (VMEM-budgeted) tile_n: single-tile path ---
    fwd_auto = jax.jit(cl_head_forward)
    loss_f32 = fwd_auto(x, target, params_f32)
    jax.block_until_ready(loss_f32)
    assert jnp.allclose(loss_f32, ref_f32, rtol=2e-2, atol=2e-2), (loss_f32, ref_f32)

    print("KERNEL_OK")
</pallas_src>

<mosaic_0001>
module attributes {stable_mosaic.version = 11 : i64} {
  func.func @_layer0_kernel(%arg0: i32, %arg1: memref<8x512xbf16, #tpu.memory_space<vmem>>, %arg2: memref<512x128xbf16, #tpu.memory_space<vmem>>, %arg3: memref<4x1x128xf32, #tpu.memory_space<vmem>>, %arg4: memref<4x1x128xf32, #tpu.memory_space<vmem>>, %arg5: memref<8x128xbf16, #tpu.memory_space<vmem>>) attributes {dimension_semantics = [#tpu.dimension_semantics<parallel>], iteration_bounds = array<i64: 4>, scalar_prefetch = 0 : i64, scratch_operands = 0 : i64, tpu.core_type = #tpu.core_type<tc>, window_params = [{pipeline_mode = #tpu.pipeline_mode<synchronous>, transform_indices = @transform_0, window_bounds = array<i64: 8, 512>}, {transform_indices = @transform_1, window_bounds = array<i64: 512, 128>}, {pipeline_mode = #tpu.pipeline_mode<synchronous>, transform_indices = @transform_2, window_bounds = array<i64: 4, 1, 128>}, {pipeline_mode = #tpu.pipeline_mode<synchronous>, transform_indices = @transform_3, window_bounds = array<i64: 4, 1, 128>}, {transform_indices = @transform_4, window_bounds = array<i64: 8, 128>}]} {
    %c0 = arith.constant 0 : index
    %c0_0 = arith.constant 0 : index
    %0 = vector.load %arg1[%c0, %c0_0] : memref<8x512xbf16, #tpu.memory_space<vmem>>, vector<8x512xbf16>
    %c0_1 = arith.constant 0 : index
    %c0_2 = arith.constant 0 : index
    %1 = vector.load %arg2[%c0_1, %c0_2] : memref<512x128xbf16, #tpu.memory_space<vmem>>, vector<512x128xbf16>
    %cst = arith.constant dense<0.000000e+00> : vector<8x128xf32>
    %2 = tpu.matmul %0, %1, %cst {dimension_numbers = #tpu.dot_dimension_numbers<[1], [0], [0], [1], [0, 0, 1, 1], [], []>} : vector<8x512xbf16>, vector<512x128xbf16>, vector<8x128xf32> -> vector<8x128xf32>
    %3 = arith.index_cast %arg0 : i32 to index
    %c0_3 = arith.constant 0 : index
    %c0_4 = arith.constant 0 : index
    %4 = vector.load %arg3[%3, %c0_3, %c0_4] : memref<4x1x128xf32, #tpu.memory_space<vmem>>, vector<1x1x128xf32>
    %5 = vector.shape_cast %4 : vector<1x1x128xf32> to vector<1x128xf32>
    %6 = arith.index_cast %arg0 : i32 to index
    %c0_5 = arith.constant 0 : index
    %c0_6 = arith.constant 0 : index
    %7 = vector.load %arg4[%6, %c0_5, %c0_6] : memref<4x1x128xf32, #tpu.memory_space<vmem>>, vector<1x1x128xf32>
    %8 = vector.shape_cast %7 : vector<1x1x128xf32> to vector<1x128xf32>
    %cst_7 = arith.constant dense<0.000000e+00> : vector<128xf32>
    %9 = vector.multi_reduction <add>, %2, %cst_7 [0] : vector<8x128xf32> to vector<128xf32>
    %10 = vector.shape_cast %9 : vector<128xf32> to vector<1x128xf32>
    %cst_8 = arith.constant 1.250000e-01 : f32
    %11 = vector.broadcast %cst_8 : f32 to vector<1x128xf32>
    %12 = arith.mulf %10, %11 : vector<1x128xf32>
    %13 = vector.broadcast %12 : vector<1x128xf32> to vector<8x128xf32>
    %14 = arith.subf %2, %13 : vector<8x128xf32>
    %15 = arith.mulf %14, %14 : vector<8x128xf32>
    %cst_9 = arith.constant dense<0.000000e+00> : vector<128xf32>
    %16 = vector.multi_reduction <add>, %15, %cst_9 [0] : vector<8x128xf32> to vector<128xf32>
    %17 = vector.shape_cast %16 : vector<128xf32> to vector<1x128xf32>
    %cst_10 = arith.constant 1.250000e-01 : f32
    %18 = vector.broadcast %cst_10 : f32 to vector<1x128xf32>
    %19 = arith.mulf %17, %18 : vector<1x128xf32>
    %cst_11 = arith.constant 9.99999974E-6 : f32
    %20 = vector.broadcast %cst_11 : f32 to vector<1x128xf32>
    %21 = arith.addf %19, %20 : vector<1x128xf32>
    %22 = math.rsqrt %21 : vector<1x128xf32>
    %23 = arith.mulf %5, %22 : vector<1x128xf32>
    %24 = vector.broadcast %23 : vector<1x128xf32> to vector<8x128xf32>
    %25 = arith.mulf %14, %24 : vector<8x128xf32>
    %26 = vector.broadcast %8 : vector<1x128xf32> to vector<8x128xf32>
    %27 = arith.addf %25, %26 : vector<8x128xf32>
    %cst_12 = arith.constant 0.000000e+00 : f32
    %28 = vector.broadcast %cst_12 : f32 to vector<8x128xf32>
    %29 = arith.maximumf %27, %28 : vector<8x128xf32>
    %30 = arith.truncf %29 : vector<8x128xf32> to vector<8x128xbf16>
    %c0_13 = arith.constant 0 : index
    %c0_14 = arith.constant 0 : index
    %31 = vector.load %arg5[%c0_13, %c0_14] : memref<8x128xbf16, #tpu.memory_space<vmem>>, vector<8x128xbf16>
    tpu.vector_store %arg5[%c0_13, %c0_14], %30 {strides = array<i32>} : memref<8x128xbf16, #tpu.memory_space<vmem>>, vector<8x128xbf16>,
    return
  }
  func.func @transform_0(%arg0: i32) -> (i32, i32) {
    %c0_i32 = arith.constant 0 : i32
    %c0_i32_0 = arith.constant 0 : i32
    %c0_i32_1 = arith.constant 0 : i32
    return %c0_i32, %c0_i32_0 : i32, i32
  }
  func.func @transform_1(%arg0: i32) -> (i32, i32) {
    %c0_i32 = arith.constant 0 : i32
    %c0_i32_0 = arith.constant 0 : i32
    return %c0_i32, %arg0 : i32, i32
  }
  func.func @transform_2(%arg0: i32) -> (i32, i32, i32) {
    %c0_i32 = arith.constant 0 : i32
    %c0_i32_0 = arith.constant 0 : i32
    %c0_i32_1 = arith.constant 0 : i32
    %c0_i32_2 = arith.constant 0 : i32
    return %c0_i32, %c0_i32_0, %c0_i32_1 : i32, i32, i32
  }
  func.func @transform_3(%arg0: i32) -> (i32, i32, i32) {
    %c0_i32 = arith.constant 0 : i32
    %c0_i32_0 = arith.constant 0 : i32
    %c0_i32_1 = arith.constant 0 : i32
    %c0_i32_2 = arith.constant 0 : i32
    return %c0_i32, %c0_i32_0, %c0_i32_1 : i32, i32, i32
  }
  func.func @transform_4(%arg0: i32) -> (i32, i32) {
    %c0_i32 = arith.constant 0 : i32
    %c0_i32_0 = arith.constant 0 : i32
    return %c0_i32, %arg0 : i32, i32
  }
}

module attributes {stable_mosaic.version = 11 : i64} {
  func.func @_layer1_kernel(%arg0: i32, %arg1: i32, %arg2: memref<8x512xbf16, #tpu.memory_space<vmem>>, %arg3: memref<8x128xf32, #tpu.memory_space<vmem>>, %arg4: memref<512x128xbf16, #tpu.memory_space<vmem>>, %arg5: memref<4x1x128xf32, #tpu.memory_space<vmem>>, %arg6: memref<4x1x128xf32, #tpu.memory_space<vmem>>, %arg7: memref<1x8x1xf32, #tpu.memory_space<vmem>>, %arg8: memref<1x8x1xf32, #tpu.memory_space<vmem>>, %arg9: memref<1x8x1xf32, #tpu.memory_space<vmem>>) attributes {dimension_semantics = [#tpu.dimension_semantics<parallel>, #tpu.dimension_semantics<arbitrary>], iteration_bounds = array<i64: 2, 2>, scalar_prefetch = 0 : i64, scratch_operands = 0 : i64, tpu.core_type = #tpu.core_type<tc>, window_params = [{pipeline_mode = #tpu.pipeline_mode<synchronous>, transform_indices = @transform_0, window_bounds = array<i64: 8, 512>}, {transform_indices = @transform_1, window_bounds = array<i64: 8, 128>}, {transform_indices = @transform_2, window_bounds = array<i64: 512, 128>}, {pipeline_mode = #tpu.pipeline_mode<synchronous>, transform_indices = @transform_3, window_bounds = array<i64: 4, 1, 128>}, {pipeline_mode = #tpu.pipeline_mode<synchronous>, transform_indices = @transform_4, window_bounds = array<i64: 4, 1, 128>}, {transform_indices = @transform_5, window_bounds = array<i64: 1, 8, 1>}, {transform_indices = @transform_6, window_bounds = array<i64: 1, 8, 1>}, {transform_indices = @transform_7, window_bounds = array<i64: 1, 8, 1>}]} {
    %c0_i32 = arith.constant 0 : i32
    %0 = arith.cmpi eq, %arg1, %c0_i32 : i32
    %1 = arith.extui %0 : i1 to i32
    %c0_i32_0 = arith.constant 0 : i32
    %2 = arith.cmpi ne, %1, %c0_i32_0 : i32
    scf.if %2 {
      %cst_36 = arith.constant 0.000000e+00 : f32
      %61 = vector.broadcast %cst_36 : f32 to vector<8x1xf32>
      %c0_37 = arith.constant 0 : index
      %c0_38 = arith.constant 0 : index
      %c0_39 = arith.constant 0 : index
      %62 = vector.load %arg7[%c0_37, %c0_38, %c0_39] : memref<1x8x1xf32, #tpu.memory_space<vmem>>, vector<1x8x1xf32>
      %63 = vector.shape_cast %62 : vector<1x8x1xf32> to vector<8x1xf32>
      %64 = vector.shape_cast %61 : vector<8x1xf32> to vector<1x8x1xf32>
      tpu.vector_store %arg7[%c0_37, %c0_38, %c0_39], %64 {strides = array<i32>} : memref<1x8x1xf32, #tpu.memory_space<vmem>>, vector<1x8x1xf32>,
      %cst_40 = arith.constant 0.000000e+00 : f32
      %65 = vector.broadcast %cst_40 : f32 to vector<8x1xf32>
      %c0_41 = arith.constant 0 : index
      %c0_42 = arith.constant 0 : index
      %c0_43 = arith.constant 0 : index
      %66 = vector.load %arg8[%c0_41, %c0_42, %c0_43] : memref<1x8x1xf32, #tpu.memory_space<vmem>>, vector<1x8x1xf32>
      %67 = vector.shape_cast %66 : vector<1x8x1xf32> to vector<8x1xf32>
      %68 = vector.shape_cast %65 : vector<8x1xf32> to vector<1x8x1xf32>
      tpu.vector_store %arg8[%c0_41, %c0_42, %c0_43], %68 {strides = array<i32>} : memref<1x8x1xf32, #tpu.memory_space<vmem>>, vector<1x8x1xf32>,
      %cst_44 = arith.constant 0.000000e+00 : f32
      %69 = vector.broadcast %cst_44 : f32 to vector<8x1xf32>
      %c0_45 = arith.constant 0 : index
      %c0_46 = arith.constant 0 : index
      %c0_47 = arith.constant 0 : index
      %70 = vector.load %arg9[%c0_45, %c0_46, %c0_47] : memref<1x8x1xf32, #tpu.memory_space<vmem>>, vector<1x8x1xf32>
      %71 = vector.shape_cast %70 : vector<1x8x1xf32> to vector<8x1xf32>
      %72 = vector.shape_cast %69 : vector<8x1xf32> to vector<1x8x1xf32>
      tpu.vector_store %arg9[%c0_45, %c0_46, %c0_47], %72 {strides = array<i32>} : memref<1x8x1xf32, #tpu.memory_space<vmem>>, vector<1x8x1xf32>,
    } else {
    }
    %c2_i32 = arith.constant 2 : i32
    %3 = arith.muli %arg0, %c2_i32 : i32
    %4 = arith.addi %3, %arg1 : i32
    %c0 = arith.constant 0 : index
    %c0_1 = arith.constant 0 : index
    %5 = vector.load %arg2[%c0, %c0_1] : memref<8x512xbf16, #tpu.memory_space<vmem>>, vector<8x512xbf16>
    %c0_2 = arith.constant 0 : index
    %c0_3 = arith.constant 0 : index
    %6 = vector.load %arg4[%c0_2, %c0_3] : memref<512x128xbf16, #tpu.memory_space<vmem>>, vector<512x128xbf16>
    %cst = arith.constant dense<0.000000e+00> : vector<8x128xf32>
    %7 = tpu.matmul %5, %6, %cst {dimension_numbers = #tpu.dot_dimension_numbers<[1], [0], [0], [1], [0, 0, 1, 1], [], []>} : vector<8x512xbf16>, vector<512x128xbf16>, vector<8x128xf32> -> vector<8x128xf32>
    %8 = arith.index_cast %4 : i32 to index
    %c0_4 = arith.constant 0 : index
    %c0_5 = arith.constant 0 : index
    %9 = vector.load %arg5[%8, %c0_4, %c0_5] : memref<4x1x128xf32, #tpu.memory_space<vmem>>, vector<1x1x128xf32>
    %10 = vector.shape_cast %9 : vector<1x1x128xf32> to vector<1x128xf32>
    %11 = arith.index_cast %4 : i32 to index
    %c0_6 = arith.constant 0 : index
    %c0_7 = arith.constant 0 : index
    %12 = vector.load %arg6[%11, %c0_6, %c0_7] : memref<4x1x128xf32, #tpu.memory_space<vmem>>, vector<1x1x128xf32>
    %13 = vector.shape_cast %12 : vector<1x1x128xf32> to vector<1x128xf32>
    %cst_8 = arith.constant dense<0.000000e+00> : vector<128xf32>
    %14 = vector.multi_reduction <add>, %7, %cst_8 [0] : vector<8x128xf32> to vector<128xf32>
    %15 = vector.shape_cast %14 : vector<128xf32> to vector<1x128xf32>
    %cst_9 = arith.constant 1.250000e-01 : f32
    %16 = vector.broadcast %cst_9 : f32 to vector<1x128xf32>
    %17 = arith.mulf %15, %16 : vector<1x128xf32>
    %18 = vector.broadcast %17 : vector<1x128xf32> to vector<8x128xf32>
    %19 = arith.subf %7, %18 : vector<8x128xf32>
    %20 = arith.mulf %19, %19 : vector<8x128xf32>
    %cst_10 = arith.constant dense<0.000000e+00> : vector<128xf32>
    %21 = vector.multi_reduction <add>, %20, %cst_10 [0] : vector<8x128xf32> to vector<128xf32>
    %22 = vector.shape_cast %21 : vector<128xf32> to vector<1x128xf32>
    %cst_11 = arith.constant 1.250000e-01 : f32
    %23 = vector.broadcast %cst_11 : f32 to vector<1x128xf32>
    %24 = arith.mulf %22, %23 : vector<1x128xf32>
    %cst_12 = arith.constant 9.99999974E-6 : f32
    %25 = vector.broadcast %cst_12 : f32 to vector<1x128xf32>
    %26 = arith.addf %24, %25 : vector<1x128xf32>
    %27 = math.rsqrt %26 : vector<1x128xf32>
    %28 = arith.mulf %10, %27 : vector<1x128xf32>
    %29 = vector.broadcast %28 : vector<1x128xf32> to vector<8x128xf32>
    %30 = arith.mulf %19, %29 : vector<8x128xf32>
    %31 = vector.broadcast %13 : vector<1x128xf32> to vector<8x128xf32>
    %32 = arith.addf %30, %31 : vector<8x128xf32>
    %c0_13 = arith.constant 0 : index
    %c0_14 = arith.constant 0 : index
    %33 = vector.load %arg3[%c0_13, %c0_14] : memref<8x128xf32, #tpu.memory_space<vmem>>, vector<8x128xf32>
    %c0_15 = arith.constant 0 : index
    %c0_16 = arith.constant 0 : index
    %c0_17 = arith.constant 0 : index
    %34 = vector.load %arg7[%c0_15, %c0_16, %c0_17] : memref<1x8x1xf32, #tpu.memory_space<vmem>>, vector<1x8x1xf32>
    %35 = vector.shape_cast %34 : vector<1x8x1xf32> to vector<8x1xf32>
    %36 = arith.mulf %32, %33 : vector<8x128xf32>
    %cst_18 = arith.constant dense<0.000000e+00> : vector<8xf32>
    %37 = vector.multi_reduction <add>, %36, %cst_18 [1] : vector<8x128xf32> to vector<8xf32>
    %38 = vector.shape_cast %37 : vector<8xf32> to vector<8x1xf32>
    %39 = arith.addf %35, %38 : vector<8x1xf32>
    %c0_19 = arith.constant 0 : index
    %c0_20 = arith.constant 0 : index
    %c0_21 = arith.constant 0 : index
    %40 = vector.load %arg7[%c0_19, %c0_20, %c0_21] : memref<1x8x1xf32, #tpu.memory_space<vmem>>, vector<1x8x1xf32>
    %41 = vector.shape_cast %40 : vector<1x8x1xf32> to vector<8x1xf32>
    %42 = vector.shape_cast %39 : vector<8x1xf32> to vector<1x8x1xf32>
    tpu.vector_store %arg7[%c0_19, %c0_20, %c0_21], %42 {strides = array<i32>} : memref<1x8x1xf32, #tpu.memory_space<vmem>>, vector<1x8x1xf32>,
    %c0_22 = arith.constant 0 : index
    %c0_23 = arith.constant 0 : index
    %c0_24 = arith.constant 0 : index
    %43 = vector.load %arg8[%c0_22, %c0_23, %c0_24] : memref<1x8x1xf32, #tpu.memory_space<vmem>>, vector<1x8x1xf32>
    %44 = vector.shape_cast %43 : vector<1x8x1xf32> to vector<8x1xf32>
    %45 = arith.mulf %32, %32 : vector<8x128xf32>
    %cst_25 = arith.constant dense<0.000000e+00> : vector<8xf32>
    %46 = vector.multi_reduction <add>, %45, %cst_25 [1] : vector<8x128xf32> to vector<8xf32>
    %47 = vector.shape_cast %46 : vector<8xf32> to vector<8x1xf32>
    %48 = arith.addf %44, %47 : vector<8x1xf32>
    %c0_26 = arith.constant 0 : index
    %c0_27 = arith.constant 0 : index
    %c0_28 = arith.constant 0 : index
    %49 = vector.load %arg8[%c0_26, %c0_27, %c0_28] : memref<1x8x1xf32, #tpu.memory_space<vmem>>, vector<1x8x1xf32>
    %50 = vector.shape_cast %49 : vector<1x8x1xf32> to vector<8x1xf32>
    %51 = vector.shape_cast %48 : vector<8x1xf32> to vector<1x8x1xf32>
    tpu.vector_store %arg8[%c0_26, %c0_27, %c0_28], %51 {strides = array<i32>} : memref<1x8x1xf32, #tpu.memory_space<vmem>>, vector<1x8x1xf32>,
    %c0_29 = arith.constant 0 : index
    %c0_30 = arith.constant 0 : index
    %c0_31 = arith.constant 0 : index
    %52 = vector.load %arg9[%c0_29, %c0_30, %c0_31] : memref<1x8x1xf32, #tpu.memory_space<vmem>>, vector<1x8x1xf32>
    %53 = vector.shape_cast %52 : vector<1x8x1xf32> to vector<8x1xf32>
    %54 = arith.mulf %33, %33 : vector<8x128xf32>
    %cst_32 = arith.constant dense<0.000000e+00> : vector<8xf32>
    %55 = vector.multi_reduction <add>, %54, %cst_32 [1] : vector<8x128xf32> to vector<8xf32>
    %56 = vector.shape_cast %55 : vector<8xf32> to vector<8x1xf32>
    %57 = arith.addf %53, %56 : vector<8x1xf32>
    %c0_33 = arith.constant 0 : index
    %c0_34 = arith.constant 0 : index
    %c0_35 = arith.constant 0 : index
    %58 = vector.load %arg9[%c0_33, %c0_34, %c0_35] : memref<1x8x1xf32, #tpu.memory_space<vmem>>, vector<1x8x1xf32>
    %59 = vector.shape_cast %58 : vector<1x8x1xf32> to vector<8x1xf32>
    %60 = vector.shape_cast %57 : vector<8x1xf32> to vector<1x8x1xf32>
    tpu.vector_store %arg9[%c0_33, %c0_34, %c0_35], %60 {strides = array<i32>} : memref<1x8x1xf32, #tpu.memory_space<vmem>>, vector<1x8x1xf32>,
    return
  }
  func.func @transform_0(%arg0: i32, %arg1: i32) -> (i32, i32) {
    %c0_i32 = arith.constant 0 : i32
    %c0_i32_0 = arith.constant 0 : i32
    %c0_i32_1 = arith.constant 0 : i32
    return %c0_i32, %c0_i32_0 : i32, i32
  }
  func.func @transform_1(%arg0: i32, %arg1: i32) -> (i32, i32) {
    %c2_i32 = arith.constant 2 : i32
    %0 = arith.muli %arg0, %c2_i32 : i32
    %1 = arith.addi %0, %arg1 : i32
    %c0_i32 = arith.constant 0 : i32
    %c0_i32_0 = arith.constant 0 : i32
    return %c0_i32, %1 : i32, i32
  }
  func.func @transform_2(%arg0: i32, %arg1: i32) -> (i32, i32) {
    %c2_i32 = arith.constant 2 : i32
    %0 = arith.muli %arg0, %c2_i32 : i32
    %1 = arith.addi %0, %arg1 : i32
    %c0_i32 = arith.constant 0 : i32
    %c0_i32_0 = arith.constant 0 : i32
    return %c0_i32, %1 : i32, i32
  }
  func.func @transform_3(%arg0: i32, %arg1: i32) -> (i32, i32, i32) {
    %c0_i32 = arith.constant 0 : i32
    %c0_i32_0 = arith.constant 0 : i32
    %c0_i32_1 = arith.constant 0 : i32
    %c0_i32_2 = arith.constant 0 : i32
    return %c0_i32, %c0_i32_0, %c0_i32_1 : i32, i32, i32
  }
  func.func @transform_4(%arg0: i32, %arg1: i32) -> (i32, i32, i32) {
    %c0_i32 = arith.constant 0 : i32
    %c0_i32_0 = arith.constant 0 : i32
    %c0_i32_1 = arith.constant 0 : i32
    %c0_i32_2 = arith.constant 0 : i32
    return %c0_i32, %c0_i32_0, %c0_i32_1 : i32, i32, i32
  }
  func.func @transform_5(%arg0: i32, %arg1: i32) -> (i32, i32, i32) {
    %c0_i32 = arith.constant 0 : i32
    %c0_i32_0 = arith.constant 0 : i32
    %c0_i32_1 = arith.constant 0 : i32
    return %arg0, %c0_i32, %c0_i32_0 : i32, i32, i32
  }
  func.func @transform_6(%arg0: i32, %arg1: i32) -> (i32, i32, i32) {
    %c0_i32 = arith.constant 0 : i32
    %c0_i32_0 = arith.constant 0 : i32
    %c0_i32_1 = arith.constant 0 : i32
    return %arg0, %c0_i32, %c0_i32_0 : i32, i32, i32
  }
  func.func @transform_7(%arg0: i32, %arg1: i32) -> (i32, i32, i32) {
    %c0_i32 = arith.constant 0 : i32
    %c0_i32_0 = arith.constant 0 : i32
    %c0_i32_1 = arith.constant 0 : i32
    return %arg0, %c0_i32, %c0_i32_0 : i32, i32, i32
  }
}

</mosaic_0001>

<llo_original>
// kernel: cl_head_forward.3
$region0: #{cl_head_forward.3}
  #allocation0 [shape = 'u32[]', space=smem, size = 0x4, offset = 0x4, fixed_abs, tag = 'smem constant byte address 0x4 - core index']
  #allocation1 [shape = 'u32[72,128]{1,0:T(1,128)}', space=vmem, size = 0x9000, scoped, tag = 'internal scratch']
  %s0 = inlined_call_operand.vmem [shape: bf16[8,512], index: 0, kind: input, shape index: {}]
  %s1 = inlined_call_operand.vmem [shape: f32[8,512], index: 1, kind: input, shape index: {}]
  %s2 = inlined_call_operand.hbm [shape: bf16[512,512], index: 2, kind: input, shape index: {}]
  %s3 = inlined_call_operand.vmem [shape: f32[4,1,128], index: 3, kind: input, shape index: {}]
  %s4 = inlined_call_operand.vmem [shape: f32[4,1,128], index: 4, kind: input, shape index: {}]
  %s5 = inlined_call_operand.vmem [shape: f32[2,8,1], index: 5, kind: output, shape index: {0}]
  %s6 = inlined_call_operand.vmem [shape: f32[2,8,1], index: 6, kind: output, shape index: {1}]
  %s7 = inlined_call_operand.vmem [shape: f32[2,8,1], index: 7, kind: output, shape index: {2}]
  %8 = xla_tuple %s5, %s6, %s7
  %s9 = sld [smem:[#allocation0]]
  $region77: #{cl_head_forward.3} parent=0
    _
  %s11 = ssub.s32 1, %s9
  %s12 = scalar_select 0, %s11, %s9
  $region1: #{cl_head_forward.3} parent=0
    #allocation2 [shape = 'u8[262144]{0}', space=vmem, size = 0x40000, scoped, tag = 'input window, operand 2']
    #allocation3 [shape = 's32[2]{0}', space=sflag, size = 0x8, scoped, tag = 'scoped memory for cl_head_forward.3']
    %13 = vsyncpa [#allocation3], 0
    %s14 = scalar_lea.sflag [#allocation3], 1
    %15 = vsyncpa %s14, 0
    loop: start=0, step=1, limit=6
    $region2: #{cl_head_forward.3} parent=1 // loop_pre_header
      _
    $region3: #{cl_head_forward.3} parent=1 // loop_header
      %s17 = sphi 0, %s21
      %p18 = scmp.ge.s32.totalorder %s17, 6
      %s24 = sphi 0, %s36
      %s25 = sphi 0, %s32
      %s26 = sphi 0, %s24
      %s27 = sphi 0, %s25
      %s28 = sphi 0, %s26
      %s29 = sphi 0, %s27
      %s37 = sphi 0, %s37
      %s39 = sphi 0, %s37
      %s40 = sphi 0, %s39
      %s54 = sphi 0, %s40
      %s64 = sphi 0, %s66
      %s67 = sphi 0, %s64
      %s68 = sphi 0, %s67
      %s84 = sphi 0, %s68
      %s94 = sphi 0, %s96
      %s97 = sphi 0, %s94
      %s98 = sphi 0, %s97
      %s114 = sphi 0, %s98
      %s118 = sphi 0, %s118
      %s120 = sphi 0, %s118
      %s121 = sphi 0, %s120
      %s135 = sphi 0, %s121
      %s139 = sphi 0, %s139
      %s141 = sphi 0, %s139
      %s142 = sphi 0, %s141
      %s156 = sphi 0, %s142
      %s162 = sphi 0, %s164
      %s165 = sphi 0, %s162
      %s166 = sphi 0, %s165
      %s182 = sphi 0, %s166
      %s188 = sphi 0, %s190
      %s191 = sphi 0, %s188
      %s192 = sphi 0, %s191
      %s208 = sphi 0, %s192
      %s214 = sphi 0, %s216
      %s217 = sphi 0, %s214
      %s218 = sphi 0, %s217
      %s234 = sphi 0, %s218
    $region4: #{cl_head_forward.3} parent=1 // loop_header_branch
      %20 = sbr.rel (%p18) target = $region8
    $region5: #{cl_head_forward.3} parent=1 // loop_body
      %s22 = ssub.s32 %s17, 1
      %s23 = ssub.s32 %s17, 2
      %s30 = sadd.s32 1, %s25
      %p31 = scmp.ge.s32.totalorder %s30, 2
      %s32 = scalar_select %p31, 0, %s30
      %s33 = sadd.s32 1, %s24
      %s34 = scalar_select %p31, %s33, %s24
      %p35 = scmp.ge.s32.totalorder %s34, 2
      %s36 = scalar_select %p35, 0, %s34
      %s38 = sadd.s32 %s37, 1
      %p41 = scmp.eq.s32.totalorder %s17, 3
      %p42 = scmp.ne.s32.totalorder %s37, %s39
      %p43 = scmp.eq.s32.totalorder %s17, 0
      %p44 = por %p42, %p43
      %p45 = scmp.ne.s32.totalorder %s37, %s39
      %p46 = scmp.eq.s32.totalorder %s22, 3
      %p47 = por %p45, %p46
      %p48 = scmp.ne.s32.totalorder %s39, %s40
      %p49 = scmp.eq.s32.totalorder %s22, 0
      %p50 = por %p48, %p49
      %p51 = scmp.ne.s32.totalorder %s39, %s40
      %p52 = scmp.eq.s32.totalorder %s23, 3
      %p53 = por %p51, %p52
      %p55 = scmp.ne.s32.totalorder %s40, %s54
      %p56 = scmp.eq.s32.totalorder %s23, 0
      %p57 = por %p55, %p56
      %s58 = smul.u32 %s24, 2
      %s59 = sadd.s32 %s58, %s25
      %s60 = smul.u32 %s36, 2
      %s61 = sadd.s32 %s60, %s32
      %s62 = ssub.s32 %s59, %s61
      %p63 = scmp.eq.s32.totalorder %s62, 0
      %s65 = sadd.s32 %s64, 1
      %s66 = scalar_select %p63, %s64, %s65
      %p69 = pneg %p63
      %p70 = scmp.eq.s32.totalorder %s17, 3
      %p71 = por %p69, %p70
      %p72 = scmp.ne.s32.totalorder %s64, %s67
      %p73 = scmp.eq.s32.totalorder %s17, 0
      %p74 = por %p72, %p73
      %p75 = scmp.ne.s32.totalorder %s64, %s67
      %p76 = scmp.eq.s32.totalorder %s22, 3
      %p77 = por %p75, %p76
      %p78 = scmp.ne.s32.totalorder %s67, %s68
      %p79 = scmp.eq.s32.totalorder %s22, 0
      %p80 = por %p78, %p79
      %p81 = scmp.ne.s32.totalorder %s67, %s68
      %p82 = scmp.eq.s32.totalorder %s23, 3
      %p83 = por %p81, %p82
      %p85 = scmp.ne.s32.totalorder %s68, %s84
      %p86 = scmp.eq.s32.totalorder %s23, 0
      %p87 = por %p85, %p86
      %s88 = smul.u32 %s24, 2
      %s89 = sadd.s32 %s88, %s25
      %s90 = smul.u32 %s36, 2
      %s91 = sadd.s32 %s90, %s32
      %s92 = ssub.s32 %s89, %s91
      %p93 = scmp.eq.s32.totalorder %s92, 0
      %s95 = sadd.s32 %s94, 1
      %s96 = scalar_select %p93, %s94, %s95
      %p99 = pneg %p93
      %p100 = scmp.eq.s32.totalorder %s17, 3
      %p101 = por %p99, %p100
      %p102 = scmp.ne.s32.totalorder %s94, %s97
      %p103 = scmp.eq.s32.totalorder %s17, 0
      %p104 = por %p102, %p103
      %p105 = scmp.ne.s32.totalorder %s94, %s97
      %p106 = scmp.eq.s32.totalorder %s22, 3
      %p107 = por %p105, %p106
      %p108 = scmp.ne.s32.totalorder %s97, %s98
      %p109 = scmp.eq.s32.totalorder %s22, 0
      %p110 = por %p108, %p109
      %p111 = scmp.ne.s32.totalorder %s97, %s98
      %p112 = scmp.eq.s32.totalorder %s23, 3
      %p113 = por %p111, %p112
      %p115 = scmp.ne.s32.totalorder %s98, %s114
      %p116 = scmp.eq.s32.totalorder %s23, 0
      %p117 = por %p115, %p116
      %s119 = sadd.s32 %s118, 1
      %p122 = scmp.eq.s32.totalorder %s17, 3
      %p123 = scmp.ne.s32.totalorder %s118, %s120
      %p124 = scmp.eq.s32.totalorder %s17, 0
      %p125 = por %p123, %p124
      %p126 = scmp.ne.s32.totalorder %s118, %s120
      %p127 = scmp.eq.s32.totalorder %s22, 3
      %p128 = por %p126, %p127
      %p129 = scmp.ne.s32.totalorder %s120, %s121
      %p130 = scmp.eq.s32.totalorder %s22, 0
      %p131 = por %p129, %p130
      %p132 = scmp.ne.s32.totalorder %s120, %s121
      %p133 = scmp.eq.s32.totalorder %s23, 3
      %p134 = por %p132, %p133
      %p136 = scmp.ne.s32.totalorder %s121, %s135
      %p137 = scmp.eq.s32.totalorder %s23, 0
      %p138 = por %p136, %p137
      %s140 = sadd.s32 %s139, 1
      %p143 = scmp.eq.s32.totalorder %s17, 3
      %p144 = scmp.ne.s32.totalorder %s139, %s141
      %p145 = scmp.eq.s32.totalorder %s17, 0
      %p146 = por %p144, %p145
      %p147 = scmp.ne.s32.totalorder %s139, %s141
      %p148 = scmp.eq.s32.totalorder %s22, 3
      %p149 = por %p147, %p148
      %p150 = scmp.ne.s32.totalorder %s141, %s142
      %p151 = scmp.eq.s32.totalorder %s22, 0
      %p152 = por %p150, %p151
      %p153 = scmp.ne.s32.totalorder %s141, %s142
      %p154 = scmp.eq.s32.totalorder %s23, 3
      %p155 = por %p153, %p154
      %p157 = scmp.ne.s32.totalorder %s142, %s156
      %p158 = scmp.eq.s32.totalorder %s23, 0
      %p159 = por %p157, %p158
      %s160 = ssub.s32 %s24, %s36
      %p161 = scmp.eq.s32.totalorder %s160, 0
      %s163 = sadd.s32 %s162, 1
      %s164 = scalar_select %p161, %s162, %s163
      %p167 = pneg %p161
      %p168 = scmp.eq.s32.totalorder %s17, 3
      %p169 = por %p167, %p168
      %p170 = scmp.ne.s32.totalorder %s162, %s165
      %p171 = scmp.eq.s32.totalorder %s17, 0
      %p172 = por %p170, %p171
      %p173 = scmp.ne.s32.totalorder %s162, %s165
      %p174 = scmp.eq.s32.totalorder %s22, 3
      %p175 = por %p173, %p174
      %p176 = scmp.ne.s32.totalorder %s165, %s166
      %p177 = scmp.eq.s32.totalorder %s22, 0
      %p178 = por %p176, %p177
      %p179 = scmp.ne.s32.totalorder %s165, %s166
      %p180 = scmp.eq.s32.totalorder %s23, 3
      %p181 = por %p179, %p180
      %p183 = scmp.ne.s32.totalorder %s166, %s182
      %p184 = scmp.eq.s32.totalorder %s23, 0
      %p185 = por %p183, %p184
      %s186 = ssub.s32 %s24, %s36
      %p187 = scmp.eq.s32.totalorder %s186, 0
      %s189 = sadd.s32 %s188, 1
      %s190 = scalar_select %p187, %s188, %s189
      %p193 = pneg %p187
      %p194 = scmp.eq.s32.totalorder %s17, 3
      %p195 = por %p193, %p194
      %p196 = scmp.ne.s32.totalorder %s188, %s191
      %p197 = scmp.eq.s32.totalorder %s17, 0
      %p198 = por %p196, %p197
      %p199 = scmp.ne.s32.totalorder %s188, %s191
      %p200 = scmp.eq.s32.totalorder %s22, 3
      %p201 = por %p199, %p200
      %p202 = scmp.ne.s32.totalorder %s191, %s192
      %p203 = scmp.eq.s32.totalorder %s22, 0
      %p204 = por %p202, %p203
      %p205 = scmp.ne.s32.totalorder %s191, %s192
      %p206 = scmp.eq.s32.totalorder %s23, 3
      %p207 = por %p205, %p206
      %p209 = scmp.ne.s32.totalorder %s192, %s208
      %p210 = scmp.eq.s32.totalorder %s23, 0
      %p211 = por %p209, %p210
      %s212 = ssub.s32 %s24, %s36
      %p213 = scmp.eq.s32.totalorder %s212, 0
      %s215 = sadd.s32 %s214, 1
      %s216 = scalar_select %p213, %s214, %s215
      %p219 = pneg %p213
      %p220 = scmp.eq.s32.totalorder %s17, 3
      %p221 = por %p219, %p220
      %p222 = scmp.ne.s32.totalorder %s214, %s217
      %p223 = scmp.eq.s32.totalorder %s17, 0
      %p224 = por %p222, %p223
      %p225 = scmp.ne.s32.totalorder %s214, %s217
      %p226 = scmp.eq.s32.totalorder %s22, 3
      %p227 = por %p225, %p226
      %p228 = scmp.ne.s32.totalorder %s217, %s218
      %p229 = scmp.eq.s32.totalorder %s22, 0
      %p230 = por %p228, %p229
      %p231 = scmp.ne.s32.totalorder %s217, %s218
      %p232 = scmp.eq.s32.totalorder %s23, 3
      %p233 = por %p231, %p232
      %p235 = scmp.ne.s32.totalorder %s218, %s234
      %p236 = scmp.eq.s32.totalorder %s23, 0
      %p237 = por %p235, %p236
      %p238 = scmp.le.s32.totalorder 1, %s17
      %p239 = scmp.lt.s32.totalorder %s17, 5
      %p240 = pnand %p238, %p239
      %p241 = pneg %p240
      // Predicated region
      $region9: #{cl_head_forward.3} parent=5 // pred_check
        _
      $region10: #{cl_head_forward.3} parent=5 // pred_check_branch
        %243 = sbr.rel (%p240) target = $region12
      $region11: #{cl_head_forward.3} parent=5 // pred_region
        %s244 = ssub.s32 %s17, 1
        // Predicated region
        $region13: #{cl_head_forward.3} parent=11 // pred_check
          %p245 = pneg %p50
        $region14: #{cl_head_forward.3} parent=11 // pred_check_branch
          %247 = sbr.rel (%p245) target = $region16
        $region15: #{cl_head_forward.3} parent=11 // pred_region
          _
        $region16: #{cl_head_forward.3} parent=11 // pred_fallthru
          _
        // Predicated region
        $region17: #{cl_head_forward.3} parent=11 // pred_check
          %p248 = pneg %p131
        $region18: #{cl_head_forward.3} parent=11 // pred_check_branch
          %250 = sbr.rel (%p248) target = $region20
        $region19: #{cl_head_forward.3} parent=11 // pred_region
          _
        $region20: #{cl_head_forward.3} parent=11 // pred_fallthru
          _
        // Predicated region
        $region21: #{cl_head_forward.3} parent=11 // pred_check
          %p251 = pneg %p152
        $region22: #{cl_head_forward.3} parent=11 // pred_check_branch
          %253 = sbr.rel (%p251) target = $region24
        $region23: #{cl_head_forward.3} parent=11 // pred_region
          _
        $region24: #{cl_head_forward.3} parent=11 // pred_fallthru
          _
      $region12: #{cl_head_forward.3} parent=5 // pred_fallthru
        _
      %p254 = scmp.lt.s32.totalorder %s17, 4
      // Predicated region
      $region25: #{cl_head_forward.3} parent=5 // pred_check
        %p255 = pneg %p254
      $region26: #{cl_head_forward.3} parent=5 // pred_check_branch
        %257 = sbr.rel (%p255) target = $region28
      $region27: #{cl_head_forward.3} parent=5 // pred_region
        // Predicated region
        $region29: #{cl_head_forward.3} parent=27 // pred_check
          %p258 = pneg %p74
        $region30: #{cl_head_forward.3} parent=27 // pred_check_branch
          %260 = sbr.rel (%p258) target = $region32
        $region31: #{cl_head_forward.3} parent=27 // pred_region
          %s261 = smul.u32 %s24, 2
          %s262 = sadd.s32 %s261, %s25
          %p263 = scmp.lt.s32.totalorder %s262, 3
          %s264 = scalar_select %p263, %s262, 3
          %s265 = smul.addr %s264, 8
          %s266 = scalar_lea.vmem %s1, %s265
          %s267 = smul.u32 %s24, 2
          %s268 = sadd.s32 %s267, %s25
        $region32: #{cl_head_forward.3} parent=27 // pred_fallthru
          _
        // Predicated region
        $region33: #{cl_head_forward.3} parent=27 // pred_check
          %p269 = pneg %p104
        $region34: #{cl_head_forward.3} parent=27 // pred_check_branch
          %271 = sbr.rel (%p269) target = $region36
        $region35: #{cl_head_forward.3} parent=27 // pred_region
          %s272 = sand.u32 %s94, 1
          %s273 = scalar_lea.sflag [#allocation3], %s272
          %s274 = sand.u32 %s94, 1
          %s275 = smul.addr %s274, 256
          %s276 = scalar_lea.vmem [#allocation2], %s275
          %s277 = smul.u32 %s24, 2
          %s278 = sadd.s32 %s277, %s25
          %280 = vsyncadd %s273, 0
          %s281 = smul.addr %s278, 4
          %s282 = scalar_lea.hbm %s2, %s281
          %s283 = sshll.u32 %s282, 4
          %s284 = int_to_ptr.hbm [resolvable:$true] %s283
          %s285 = sshll.u32 %s276, 4
          %s286 = int_to_ptr.vmem [resolvable:$true] %s285
          %291 = dma.hbm_to_vmem [thread:$0]  %s284, 4096, %s286, %s273, 256, 64, 4
        $region36: #{cl_head_forward.3} parent=27 // pred_fallthru
          _
      $region28: #{cl_head_forward.3} parent=5 // pred_fallthru
        _
      %p292 = scmp.le.s32.totalorder 1, %s17
      %p293 = scmp.lt.s32.totalorder %s17, 5
      %p294 = pnand %p292, %p293
      %p295 = pneg %p294
      // Predicated region
      $region37: #{cl_head_forward.3} parent=5 // pred_check
        _
      $region38: #{cl_head_forward.3} parent=5 // pred_check_branch
        %297 = sbr.rel (%p294) target = $region40
      $region39: #{cl_head_forward.3} parent=5 // pred_region
        %s298 = ssub.s32 %s17, 1
        %s299 = sand.u32 %s97, 1
        %s300 = scalar_lea.sflag [#allocation3], %s299
        %s301 = sand.u32 %s97, 1
        %s302 = smul.addr %s301, 256
        %s303 = scalar_lea.vmem [#allocation2], %s302
        // Predicated region
        $region41: #{cl_head_forward.3} parent=39 // pred_check
          %p304 = pneg %p110
        $region42: #{cl_head_forward.3} parent=39 // pred_check_branch
          %306 = sbr.rel (%p304) target = $region44
        $region43: #{cl_head_forward.3} parent=39 // pred_region
          %308 = dma.done %s300, 4096
        $region44: #{cl_head_forward.3} parent=39 // pred_fallthru
          _
        %p309 = pneg %p50
        %p310 = pneg %p47
        %s311 = smul.u32 %s26, 2
        %s312 = sadd.s32 %s311, %s27
        %p313 = scmp.lt.s32.totalorder %s312, 3
        %s314 = scalar_select %p313, %s312, 3
        %s315 = smul.addr %s314, 8
        %s316 = scalar_lea.vmem %s1, %s315
        %p317 = pneg %p80
        %p318 = pneg %p77
        %s319 = sand.u32 %s97, 1
        %s320 = scalar_lea.sflag [#allocation3], %s319
        %s321 = sand.u32 %s97, 1
        %s322 = smul.addr %s321, 256
        %s323 = scalar_lea.vmem [#allocation2], %s322
        %p324 = pneg %p110
        %p325 = pneg %p107
        %p326 = pneg %p131
        %p327 = pneg %p128
        %p328 = pneg %p152
        %p329 = pneg %p149
        %p330 = pneg %p178
        %p331 = pneg %p175
        %p332 = scmp.lt.s32.totalorder %s26, 1
        %s333 = scalar_select %p332, %s26, 1
        %s334 = smul.addr %s333, 8
        %s335 = scalar_lea.vmem %s5, %s334
        %p336 = pneg %p204
        %p337 = pneg %p201
        %p338 = scmp.lt.s32.totalorder %s26, 1
        %s339 = scalar_select %p338, %s26, 1
        %s340 = smul.addr %s339, 8
        %s341 = scalar_lea.vmem %s6, %s340
        %p342 = pneg %p230
        %p343 = pneg %p227
        %p344 = scmp.lt.s32.totalorder %s26, 1
        %s345 = scalar_select %p344, %s26, 1
        %s346 = smul.addr %s345, 8
        %s347 = scalar_lea.vmem %s7, %s346
        %s348 = smul.u32 %s26, 2
        %s349 = sadd.s32 %s348, %s27
        %p350 = scmp.lt.s32.totalorder %s349, 3
        %s351 = scalar_select %p350, %s349, 3
        %s352 = smul.addr %s351, 8
        %s353 = scalar_lea.vmem %s1, %s352
        %s354 = smul.u32 %s26, 2
        %s355 = sadd.s32 %s354, %s27
        %s356 = smul.u32 %s26, 2
        %s357 = sadd.s32 %s356, %s27
        %p358 = scmp.lt.s32.totalorder %s26, 1
        %s359 = scalar_select %p358, %s26, 1
        %s360 = smul.addr %s359, 8
        %s361 = scalar_lea.vmem %s5, %s360
        %p362 = scmp.lt.s32.totalorder %s26, 1
        %s363 = scalar_select %p362, %s26, 1
        %s364 = smul.addr %s363, 8
        %s365 = scalar_lea.vmem %s6, %s364
        %p366 = scmp.lt.s32.totalorder %s26, 1
        %s367 = scalar_select %p366, %s26, 1
        %s368 = smul.addr %s367, 8
        %s369 = scalar_lea.vmem %s7, %s368
        %p370 = scmp.eq.s32.totalorder %s27, 0
        // Predicated region
        $region45: #{cl_head_forward.3} parent=39 // pred_check
          %p371 = pneg %p370
        $region46: #{cl_head_forward.3} parent=39 // pred_check_branch
          %373 = sbr.rel (%p371) target = $region48
        $region47: #{cl_head_forward.3} parent=39 // pred_region
          %vm374 = vcmask 7168
          %375 = vst.msk [vmem:[%s361] sm:$0xff] %vm374, 0.0
          %376 = vst.msk [vmem:[%s365] sm:$0xff] %vm374, 0.0
          %377 = vst.msk [vmem:[%s369] sm:$0xff] %vm374, 0.0
        $region48: #{cl_head_forward.3} parent=39 // pred_fallthru
          _
        %s378 = smul.u32 %s26, 2
        %s379 = sadd.s32 %s378, %s27
        %v380 = vld [vmem:[%s0] sm:$0xff]
        %v381 = vld [vmem:[%s0 + $0x8] sm:$0xff]
        %v382 = vld [vmem:[%s303] sm:$0xf]
        %v383 = vld [vmem:[%s303 + $0x4] sm:$0xf]
        %v384 = vld [vmem:[%s303 + $0x8] sm:$0xf]
        %v385 = vld [vmem:[%s303 + $0xc] sm:$0xf]
        %v386 = vld [vmem:[%s303 + $0x10] sm:$0xf]
        %v387 = vld [vmem:[%s303 + $0x14] sm:$0xf]
        %v388 = vld [vmem:[%s303 + $0x18] sm:$0xf]
        %v389 = vld [vmem:[%s303 + $0x1c] sm:$0xf]
        %v390 = vld [vmem:[%s303 + $0x20] sm:$0xf]
        %v391 = vld [vmem:[%s303 + $0x24] sm:$0xf]
        %v392 = vld [vmem:[%s303 + $0x28] sm:$0xf]
        %v393 = vld [vmem:[%s303 + $0x2c] sm:$0xf]
        %v394 = vld [vmem:[%s303 + $0x30] sm:$0xf]
        %v395 = vld [vmem:[%s303 + $0x34] sm:$0xf]
        %v396 = vld [vmem:[%s303 + $0x38] sm:$0xf]
        %v397 = vld [vmem:[%s303 + $0x3c] sm:$0xf]
        %v398 = vld [vmem:[%s303 + $0x40] sm:$0xf]
        %v399 = vld [vmem:[%s303 + $0x44] sm:$0xf]
        %v400 = vld [vmem:[%s303 + $0x48] sm:$0xf]
        %v401 = vld [vmem:[%s303 + $0x4c] sm:$0xf]
        %v402 = vld [vmem:[%s303 + $0x50] sm:$0xf]
        %v403 = vld [vmem:[%s303 + $0x54] sm:$0xf]
        %v404 = vld [vmem:[%s303 + $0x58] sm:$0xf]
        %v405 = vld [vmem:[%s303 + $0x5c] sm:$0xf]
        %v406 = vld [vmem:[%s303 + $0x60] sm:$0xf]
        %v407 = vld [vmem:[%s303 + $0x64] sm:$0xf]
        %v408 = vld [vmem:[%s303 + $0x68] sm:$0xf]
        %v409 = vld [vmem:[%s303 + $0x6c] sm:$0xf]
        %v410 = vld [vmem:[%s303 + $0x70] sm:$0xf]
        %v411 = vld [vmem:[%s303 + $0x74] sm:$0xf]
        %v412 = vld [vmem:[%s303 + $0x78] sm:$0xf]
        %v413 = vld [vmem:[%s303 + $0x7c] sm:$0xf]
        %v414 = vld [vmem:[%s303 + $0x80] sm:$0xf]
        %v415 = vld [vmem:[%s303 + $0x84] sm:$0xf]
        %v416 = vld [vmem:[%s303 + $0x88] sm:$0xf]
        %v417 = vld [vmem:[%s303 + $0x8c] sm:$0xf]
        %v418 = vld [vmem:[%s303 + $0x90] sm:$0xf]
        %v419 = vld [vmem:[%s303 + $0x94] sm:$0xf]
        %v420 = vld [vmem:[%s303 + $0x98] sm:$0xf]
        %v421 = vld [vmem:[%s303 + $0x9c] sm:$0xf]
        %v422 = vld [vmem:[%s303 + $0xa0] sm:$0xf]
        %v423 = vld [vmem:[%s303 + $0xa4] sm:$0xf]
        %v424 = vld [vmem:[%s303 + $0xa8] sm:$0xf]
        %v425 = vld [vmem:[%s303 + $0xac] sm:$0xf]
        %v426 = vld [vmem:[%s303 + $0xb0] sm:$0xf]
        %v427 = vld [vmem:[%s303 + $0xb4] sm:$0xf]
        %v428 = vld [vmem:[%s303 + $0xb8] sm:$0xf]
        %v429 = vld [vmem:[%s303 + $0xbc] sm:$0xf]
        %v430 = vld [vmem:[%s303 + $0xc0] sm:$0xf]
        %v431 = vld [vmem:[%s303 + $0xc4] sm:$0xf]
        %v432 = vld [vmem:[%s303 + $0xc8] sm:$0xf]
        %v433 = vld [vmem:[%s303 + $0xcc] sm:$0xf]
        %v434 = vld [vmem:[%s303 + $0xd0] sm:$0xf]
        %v435 = vld [vmem:[%s303 + $0xd4] sm:$0xf]
        %v436 = vld [vmem:[%s303 + $0xd8] sm:$0xf]
        %v437 = vld [vmem:[%s303 + $0xdc] sm:$0xf]
        %v438 = vld [vmem:[%s303 + $0xe0] sm:$0xf]
        %v439 = vld [vmem:[%s303 + $0xe4] sm:$0xf]
        %v440 = vld [vmem:[%s303 + $0xe8] sm:$0xf]
        %v441 = vld [vmem:[%s303 + $0xec] sm:$0xf]
        %v442 = vld [vmem:[%s303 + $0xf0] sm:$0xf]
        %v443 = vld [vmem:[%s303 + $0xf4] sm:$0xf]
        %v444 = vld [vmem:[%s303 + $0xf8] sm:$0xf]
        %v445 = vld [vmem:[%s303 + $0xfc] sm:$0xf]
        %v448 = vunpack.c.l.b16 %v380
        %v449 = vunpack.c.h.b16 %v380
        %v450 = vunpack.c.l.b16 %v381
        %v451 = vunpack.c.h.b16 %v381
        %v452 = vpack.c.b16 %v448, %v448
        %v453 = vpack.c.b16 %v449, %v449
        %v454 = vpack.c.b16 %v450, %v450
        %v455 = vpack.c.b16 %v451, %v451
        %v524 = vunpack.c.l.b16 %v382
        %v525 = vunpack.c.l.b16 %v383
        %v526 = vunpack.c.l.b16 %v384
        %v527 = vunpack.c.l.b16 %v385
        %v528 = vunpack.c.l.b16 %v386
        %v529 = vunpack.c.l.b16 %v387
        %v530 = vunpack.c.l.b16 %v388
        %v531 = vunpack.c.l.b16 %v389
        %v532 = vunpack.c.l.b16 %v390
        %v533 = vunpack.c.l.b16 %v391
        %v534 = vunpack.c.l.b16 %v392
        %v535 = vunpack.c.l.b16 %v393
        %v536 = vunpack.c.l.b16 %v394
        %v537 = vunpack.c.l.b16 %v395
        %v538 = vunpack.c.l.b16 %v396
        %v539 = vunpack.c.l.b16 %v397
        %v540 = vunpack.c.l.b16 %v398
        %v541 = vunpack.c.l.b16 %v399
        %v542 = vunpack.c.l.b16 %v400
        %v543 = vunpack.c.l.b16 %v401
        %v544 = vunpack.c.l.b16 %v402
        %v545 = vunpack.c.l.b16 %v403
        %v546 = vunpack.c.l.b16 %v404
        %v547 = vunpack.c.l.b16 %v405
        %v548 = vunpack.c.l.b16 %v406
        %v549 = vunpack.c.l.b16 %v407
        %v550 = vunpack.c.l.b16 %v408
        %v551 = vunpack.c.l.b16 %v409
        %v552 = vunpack.c.l.b16 %v410
        %v553 = vunpack.c.l.b16 %v411
        %v554 = vunpack.c.l.b16 %v412
        %v555 = vunpack.c.l.b16 %v413
        %v556 = vunpack.c.l.b16 %v414
        %v557 = vunpack.c.l.b16 %v415
        %v558 = vunpack.c.l.b16 %v416
        %v559 = vunpack.c.l.b16 %v417
        %v560 = vunpack.c.l.b16 %v418
        %v561 = vunpack.c.l.b16 %v419
        %v562 = vunpack.c.l.b16 %v420
        %v563 = vunpack.c.l.b16 %v421
        %v564 = vunpack.c.l.b16 %v422
        %v565 = vunpack.c.l.b16 %v423
        %v566 = vunpack.c.l.b16 %v424
        %v567 = vunpack.c.l.b16 %v425
        %v568 = vunpack.c.l.b16 %v426
        %v569 = vunpack.c.l.b16 %v427
        %v570 = vunpack.c.l.b16 %v428
        %v571 = vunpack.c.l.b16 %v429
        %v572 = vunpack.c.l.b16 %v430
        %v573 = vunpack.c.l.b16 %v431
        %v574 = vunpack.c.l.b16 %v432
        %v575 = vunpack.c.l.b16 %v433
        %v576 = vunpack.c.l.b16 %v434
        %v577 = vunpack.c.l.b16 %v435
        %v578 = vunpack.c.l.b16 %v436
        %v579 = vunpack.c.l.b16 %v437
        %v580 = vunpack.c.l.b16 %v438
        %v581 = vunpack.c.l.b16 %v439
        %v582 = vunpack.c.l.b16 %v440
        %v583 = vunpack.c.l.b16 %v441
        %v584 = vunpack.c.l.b16 %v442
        %v585 = vunpack.c.l.b16 %v443
        %v586 = vunpack.c.l.b16 %v444
        %v587 = vunpack.c.l.b16 %v445
        %v588 = vpack.c.b16 %v525, %v524
        %v589 = vpack.c.b16 %v527, %v526
        %v590 = vpack.c.b16 %v529, %v528
        %v591 = vpack.c.b16 %v531, %v530
        %v592 = vpack.c.b16 %v533, %v532
        %v593 = vpack.c.b16 %v535, %v534
        %v594 = vpack.c.b16 %v537, %v536
        %v595 = vpack.c.b16 %v539, %v538
        %v596 = vpack.c.b16 %v541, %v540
        %v597 = vpack.c.b16 %v543, %v542
        %v598 = vpack.c.b16 %v545, %v544
        %v599 = vpack.c.b16 %v547, %v546
        %v600 = vpack.c.b16 %v549, %v548
        %v601 = vpack.c.b16 %v551, %v550
        %v602 = vpack.c.b16 %v553, %v552
        %v603 = vpack.c.b16 %v555, %v554
        %v604 = vpack.c.b16 %v557, %v556
        %v605 = vpack.c.b16 %v559, %v558
        %v606 = vpack.c.b16 %v561, %v560
        %v607 = vpack.c.b16 %v563, %v562
        %v608 = vpack.c.b16 %v565, %v564
        %v609 = vpack.c.b16 %v567, %v566
        %v610 = vpack.c.b16 %v569, %v568
        %v611 = vpack.c.b16 %v571, %v570
        %v612 = vpack.c.b16 %v573, %v572
        %v613 = vpack.c.b16 %v575, %v574
        %v614 = vpack.c.b16 %v577, %v576
        %v615 = vpack.c.b16 %v579, %v578
        %v616 = vpack.c.b16 %v581, %v580
        %v617 = vpack.c.b16 %v583, %v582
        %v618 = vpack.c.b16 %v585, %v584
        %v619 = vpack.c.b16 %v587, %v586
        %652 = vmatpush.bf16.msra.mxu0 %v595
        %653 = vmatpush.bf16.msra.mxu0 %v594
        %654 = vmatpush.bf16.msra.mxu0 %v593
        %655 = vmatpush.bf16.msra.mxu0 %v592
        %656 = vmatpush.bf16.msra.mxu0 %v591
        %657 = vmatpush.bf16.msra.mxu0 %v590
        %658 = vmatpush.bf16.msra.mxu0 %v589
        %659 = vmatpush.bf16.msra.mxu0 %v588
        %660 = vmatmul.bf16.gmra.mxu0 %v452
        %v661 = vpop.f32.mrf.mxu0
        %v662 = vadd.f32 0.0, %v661
        %v663 = vpop.f32.mrf.mxu0
        %664 = vdwg.mxu0
        %665 = vmatpush.bf16.msra.mxu0 %v603
        %666 = vmatpush.bf16.msra.mxu0 %v602
        %667 = vmatpush.bf16.msra.mxu0 %v601
        %668 = vmatpush.bf16.msra.mxu0 %v600
        %669 = vmatpush.bf16.msra.mxu0 %v599
        %670 = vmatpush.bf16.msra.mxu0 %v598
        %671 = vmatpush.bf16.msra.mxu0 %v597
        %672 = vmatpush.bf16.msra.mxu0 %v596
        %673 = vmatmul.bf16.gmra.mxu0 %v453
        %v674 = vpop.f32.mrf.mxu0
        %v675 = vadd.f32 %v662, %v674
        %v676 = vpop.f32.mrf.mxu0
        %677 = vdwg.mxu0
        %678 = vmatpush.bf16.msra.mxu0 %v611
        %679 = vmatpush.bf16.msra.mxu0 %v610
        %680 = vmatpush.bf16.msra.mxu0 %v609
        %681 = vmatpush.bf16.msra.mxu0 %v608
        %682 = vmatpush.bf16.msra.mxu0 %v607
        %683 = vmatpush.bf16.msra.mxu0 %v606
        %684 = vmatpush.bf16.msra.mxu0 %v605
        %685 = vmatpush.bf16.msra.mxu0 %v604
        %686 = vmatmul.bf16.gmra.mxu0 %v454
        %v687 = vpop.f32.mrf.mxu0
        %v688 = vadd.f32 %v675, %v687
        %v689 = vpop.f32.mrf.mxu0
        %690 = vdwg.mxu0
        %691 = vmatpush.bf16.msra.mxu0 %v619
        %692 = vmatpush.bf16.msra.mxu0 %v618
        %693 = vmatpush.bf16.msra.mxu0 %v617
        %694 = vmatpush.bf16.msra.mxu0 %v616
        %695 = vmatpush.bf16.msra.mxu0 %v615
        %696 = vmatpush.bf16.msra.mxu0 %v614
        %697 = vmatpush.bf16.msra.mxu0 %v613
        %698 = vmatpush.bf16.msra.mxu0 %v612
        %699 = vmatmul.bf16.gmra.mxu0 %v455
        %v700 = vpop.f32.mrf.mxu0
        %v701 = vadd.f32 %v688, %v700
        %v702 = vpop.f32.mrf.mxu0
        %703 = vdwg.mxu0
        %s704 = scalar_lea.vmem %s3, %s379
        %v705 = vld [vmem:[%s704] sm:$0x1]
        %s706 = scalar_lea.vmem %s4, %s379
        %v707 = vld [vmem:[%s706] sm:$0x1]
        %v708 = vrot.slane %v701, 4
        %v709 = vadd.f32 %v701, %v708
        %v710 = vrot.slane %v709, 2
        %v711 = vadd.f32 %v709, %v710
        %v712 = vrot.slane %v711, 1
        %v713 = vadd.f32 %v711, %v712
        %v714 = vmul.f32 %v713, 0.125
        %v715 = vsub.f32 %v701, %v714
        %v716 = vmul.f32 %v715, %v715
        %v717 = vrot.slane %v716, 4
        %v718 = vadd.f32 %v716, %v717
        %v719 = vrot.slane %v718, 2
        %v720 = vadd.f32 %v718, %v719
        %v721 = vrot.slane %v720, 1
        %v722 = vadd.f32 %v720, %v721
        %v723 = vmul.f32 %v722, 0.125
        %v724 = vadd.f32 %v723, 1e-05
        %v725 = vrsqrt.pop %v724
        %v726 = vmul.f32 %v725, %v724
        %v727 = vmul.f32 %v726, %v725
        %v728 = vmul.f32 0.5, %v727
        %v729 = vsub.f32 1.5, %v728
        %v730 = vmul.f32 %v725, %v729
        %vm731 = vweird.f32 %v724
        %vm732 = vweird.f32 %v725
        %vm733 = vmor %vm731, %vm732
        %v734 = vsel %vm733, %v725, %v730
        %v735 = vmul.f32 %v705, %v734
        %v737 = vperm.slane %v735, 0
        %v739 = vmul.f32 %v715, %v737
        %v741 = vperm.slane %v707, 0
        %v743 = vadd.f32 %v739, %v741
        %v744 = vld [vmem:[%s353] sm:$0xff]
        %v745 = vld [vmem:[%s361] sm:$0xff]
        %v746 = vmul.f32 %v743, %v744
        %747 = vadd.xlane.f32.xlu0 %v746
        %v748 = vpop.xlane.xlu0 %747
        %v749 = vadd.f32 %v745, %v748
        %vm750 = vcmask 7168
        %751 = vst.msk [vmem:[%s361] sm:$0xff] %vm750, %v749
        %v752 = vld [vmem:[%s365] sm:$0xff]
        %v753 = vmul.f32 %v743, %v743
        %754 = vadd.xlane.f32.xlu0 %v753
        %v755 = vpop.xlane.xlu0 %754
        %v756 = vadd.f32 %v752, %v755
        %757 = vst.msk [vmem:[%s365] sm:$0xff] %vm750, %v756
        %v758 = vld [vmem:[%s369] sm:$0xff]
        %v759 = vmul.f32 %v744, %v744
        %760 = vadd.xlane.f32.xlu0 %v759
        %v761 = vpop.xlane.xlu0 %760
        %v762 = vadd.f32 %v758, %v761
        %763 = vst.msk [vmem:[%s369] sm:$0xff] %vm750, %v762
        %p764 = scmp.lt.s32.totalorder %s26, 1
        %s765 = scalar_select %p764, %s26, 1
        %s766 = smul.addr %s765, 8
        %s767 = scalar_lea.vmem %s5, %s766
        %p768 = scmp.lt.s32.totalorder %s26, 1
        %s769 = scalar_select %p768, %s26, 1
        %s770 = smul.addr %s769, 8
        %s771 = scalar_lea.vmem %s6, %s770
        %p772 = scmp.lt.s32.totalorder %s26, 1
        %s773 = scalar_select %p772, %s26, 1
        %s774 = smul.addr %s773, 8
        %s775 = scalar_lea.vmem %s7, %s774
        // Predicated region
        $region49: #{cl_head_forward.3} parent=39 // pred_check
          %p776 = pneg %p175
        $region50: #{cl_head_forward.3} parent=39 // pred_check_branch
          %778 = sbr.rel (%p776) target = $region52
        $region51: #{cl_head_forward.3} parent=39 // pred_region
          _
        $region52: #{cl_head_forward.3} parent=39 // pred_fallthru
          _
        // Predicated region
        $region53: #{cl_head_forward.3} parent=39 // pred_check
          %p779 = pneg %p201
        $region54: #{cl_head_forward.3} parent=39 // pred_check_branch
          %781 = sbr.rel (%p779) target = $region56
        $region55: #{cl_head_forward.3} parent=39 // pred_region
          _
        $region56: #{cl_head_forward.3} parent=39 // pred_fallthru
          _
        // Predicated region
        $region57: #{cl_head_forward.3} parent=39 // pred_check
          %p782 = pneg %p227
        $region58: #{cl_head_forward.3} parent=39 // pred_check_branch
          %784 = sbr.rel (%p782) target = $region60
        $region59: #{cl_head_forward.3} parent=39 // pred_region
          _
        $region60: #{cl_head_forward.3} parent=39 // pred_fallthru
          _
      $region40: #{cl_head_forward.3} parent=5 // pred_fallthru
        _
      %p785 = scmp.le.s32.totalorder 2, %s17
      // Predicated region
      $region61: #{cl_head_forward.3} parent=5 // pred_check
        %p786 = pneg %p785
      $region62: #{cl_head_forward.3} parent=5 // pred_check_branch
        %788 = sbr.rel (%p786) target = $region64
      $region63: #{cl_head_forward.3} parent=5 // pred_region
        %s789 = ssub.s32 %s17, 2
        // Predicated region
        $region65: #{cl_head_forward.3} parent=63 // pred_check
          %p790 = pneg %p181
        $region66: #{cl_head_forward.3} parent=63 // pred_check_branch
          %792 = sbr.rel (%p790) target = $region68
        $region67: #{cl_head_forward.3} parent=63 // pred_region
          %p793 = scmp.lt.s32.totalorder %s28, 1
          %s794 = scalar_select %p793, %s28, 1
          %s795 = smul.addr %s794, 8
          %s796 = scalar_lea.vmem %s5, %s795
        $region68: #{cl_head_forward.3} parent=63 // pred_fallthru
          _
        // Predicated region
        $region69: #{cl_head_forward.3} parent=63 // pred_check
          %p797 = pneg %p207
        $region70: #{cl_head_forward.3} parent=63 // pred_check_branch
          %799 = sbr.rel (%p797) target = $region72
        $region71: #{cl_head_forward.3} parent=63 // pred_region
          %p800 = scmp.lt.s32.totalorder %s28, 1
          %s801 = scalar_select %p800, %s28, 1
          %s802 = smul.addr %s801, 8
          %s803 = scalar_lea.vmem %s6, %s802
        $region72: #{cl_head_forward.3} parent=63 // pred_fallthru
          _
        // Predicated region
        $region73: #{cl_head_forward.3} parent=63 // pred_check
          %p804 = pneg %p233
        $region74: #{cl_head_forward.3} parent=63 // pred_check_branch
          %806 = sbr.rel (%p804) target = $region76
        $region75: #{cl_head_forward.3} parent=63 // pred_region
          %p807 = scmp.lt.s32.totalorder %s28, 1
          %s808 = scalar_select %p807, %s28, 1
          %s809 = smul.addr %s808, 8
          %s810 = scalar_lea.vmem %s7, %s809
        $region76: #{cl_head_forward.3} parent=63 // pred_fallthru
          _
      $region64: #{cl_head_forward.3} parent=5 // pred_fallthru
        _
    $region6: #{cl_head_forward.3} parent=1 // loop_footer
      %s21 = sadd.s32 1, %s17
    $region7: #{cl_head_forward.3} parent=1 // loop_footer_branch
      %16 = sbr.rel target = $region3
    $region8: #{cl_head_forward.3} parent=1 // loop_exit
      _
    %811 = vsyncpa [#allocation3], 1
    %s812 = scalar_lea.sflag [#allocation3], 1
    %813 = vsyncpa %s812, 1

// kernel: cl_head_forward.2
$region0: #{cl_head_forward.2}
  #allocation0 [shape = 'u32[]', space=smem, size = 0x4, offset = 0x4, fixed_abs, tag = 'smem constant byte address 0x4 - core index']
  #allocation1 [shape = 'u32[72,128]{1,0:T(1,128)}', space=vmem, size = 0x9000, scoped, tag = 'internal scratch']
  %s0 = inlined_call_operand.vmem [shape: bf16[8,512], index: 0, kind: input, shape index: {}]
  %s1 = inlined_call_operand.hbm [shape: bf16[512,512], index: 1, kind: input, shape index: {}]
  %s2 = inlined_call_operand.vmem [shape: f32[4,1,128], index: 2, kind: input, shape index: {}]
  %s3 = inlined_call_operand.vmem [shape: f32[4,1,128], index: 3, kind: input, shape index: {}]
  %s4 = inlined_call_operand.vmem [shape: bf16[8,512], index: 4, kind: output, shape index: {}]
  %s5 = sld [smem:[#allocation0]]
  $region53: #{cl_head_forward.2} parent=0
    _
  %s7 = ssub.s32 1, %s5
  %s8 = scalar_select 0, %s7, %s5
  $region1: #{cl_head_forward.2} parent=0
    #allocation2 [shape = 'u8[262144]{0}', space=vmem, size = 0x40000, scoped, tag = 'input window, operand 1']
    #allocation3 [shape = 's32[2]{0}', space=sflag, size = 0x8, scoped, tag = 'scoped memory for cl_head_forward.2']
    %9 = vsyncpa [#allocation3], 0
    %s10 = scalar_lea.sflag [#allocation3], 1
    %11 = vsyncpa %s10, 0
    loop: start=0, step=1, limit=6
    $region2: #{cl_head_forward.2} parent=1 // loop_pre_header
      _
    $region3: #{cl_head_forward.2} parent=1 // loop_header
      %s13 = sphi 0, %s17
      %p14 = scmp.ge.s32.totalorder %s13, 6
      %s21 = sphi 0, %s21
      %s23 = sphi 0, %s21
      %s24 = sphi 0, %s23
      %s38 = sphi 0, %s24
      %s44 = sphi 0, %s46
      %s47 = sphi 0, %s44
      %s48 = sphi 0, %s47
      %s64 = sphi 0, %s48
      %s68 = sphi 0, %s68
      %s70 = sphi 0, %s68
      %s71 = sphi 0, %s70
      %s85 = sphi 0, %s71
      %s89 = sphi 0, %s89
      %s91 = sphi 0, %s89
      %s92 = sphi 0, %s91
      %s106 = sphi 0, %s92
      %s112 = sphi 0, %s114
      %s115 = sphi 0, %s112
      %s116 = sphi 0, %s115
      %s132 = sphi 0, %s116
    $region4: #{cl_head_forward.2} parent=1 // loop_header_branch
      %16 = sbr.rel (%p14) target = $region8
    $region5: #{cl_head_forward.2} parent=1 // loop_body
      %s18 = ssub.s32 %s13, 1
      %s19 = ssub.s32 %s13, 2
      %s20 = sadd.s32 %s13, 1
      %s22 = sadd.s32 %s21, 1
      %p25 = scmp.eq.s32.totalorder %s13, 3
      %p26 = scmp.ne.s32.totalorder %s21, %s23
      %p27 = scmp.eq.s32.totalorder %s13, 0
      %p28 = por %p26, %p27
      %p29 = scmp.ne.s32.totalorder %s21, %s23
      %p30 = scmp.eq.s32.totalorder %s18, 3
      %p31 = por %p29, %p30
      %p32 = scmp.ne.s32.totalorder %s23, %s24
      %p33 = scmp.eq.s32.totalorder %s18, 0
      %p34 = por %p32, %p33
      %p35 = scmp.ne.s32.totalorder %s23, %s24
      %p36 = scmp.eq.s32.totalorder %s19, 3
      %p37 = por %p35, %p36
      %p39 = scmp.ne.s32.totalorder %s24, %s38
      %p40 = scmp.eq.s32.totalorder %s19, 0
      %p41 = por %p39, %p40
      %s42 = ssub.s32 %s13, %s20
      %p43 = scmp.eq.s32.totalorder %s42, 0
      %s45 = sadd.s32 %s44, 1
      %s46 = scalar_select %p43, %s44, %s45
      %p49 = pneg %p43
      %p50 = scmp.eq.s32.totalorder %s13, 3
      %p51 = por %p49, %p50
      %p52 = scmp.ne.s32.totalorder %s44, %s47
      %p53 = scmp.eq.s32.totalorder %s13, 0
      %p54 = por %p52, %p53
      %p55 = scmp.ne.s32.totalorder %s44, %s47
      %p56 = scmp.eq.s32.totalorder %s18, 3
      %p57 = por %p55, %p56
      %p58 = scmp.ne.s32.totalorder %s47, %s48
      %p59 = scmp.eq.s32.totalorder %s18, 0
      %p60 = por %p58, %p59
      %p61 = scmp.ne.s32.totalorder %s47, %s48
      %p62 = scmp.eq.s32.totalorder %s19, 3
      %p63 = por %p61, %p62
      %p65 = scmp.ne.s32.totalorder %s48, %s64
      %p66 = scmp.eq.s32.totalorder %s19, 0
      %p67 = por %p65, %p66
      %s69 = sadd.s32 %s68, 1
      %p72 = scmp.eq.s32.totalorder %s13, 3
      %p73 = scmp.ne.s32.totalorder %s68, %s70
      %p74 = scmp.eq.s32.totalorder %s13, 0
      %p75 = por %p73, %p74
      %p76 = scmp.ne.s32.totalorder %s68, %s70
      %p77 = scmp.eq.s32.totalorder %s18, 3
      %p78 = por %p76, %p77
      %p79 = scmp.ne.s32.totalorder %s70, %s71
      %p80 = scmp.eq.s32.totalorder %s18, 0
      %p81 = por %p79, %p80
      %p82 = scmp.ne.s32.totalorder %s70, %s71
      %p83 = scmp.eq.s32.totalorder %s19, 3
      %p84 = por %p82, %p83
      %p86 = scmp.ne.s32.totalorder %s71, %s85
      %p87 = scmp.eq.s32.totalorder %s19, 0
      %p88 = por %p86, %p87
      %s90 = sadd.s32 %s89, 1
      %p93 = scmp.eq.s32.totalorder %s13, 3
      %p94 = scmp.ne.s32.totalorder %s89, %s91
      %p95 = scmp.eq.s32.totalorder %s13, 0
      %p96 = por %p94, %p95
      %p97 = scmp.ne.s32.totalorder %s89, %s91
      %p98 = scmp.eq.s32.totalorder %s18, 3
      %p99 = por %p97, %p98
      %p100 = scmp.ne.s32.totalorder %s91, %s92
      %p101 = scmp.eq.s32.totalorder %s18, 0
      %p102 = por %p100, %p101
      %p103 = scmp.ne.s32.totalorder %s91, %s92
      %p104 = scmp.eq.s32.totalorder %s19, 3
      %p105 = por %p103, %p104
      %p107 = scmp.ne.s32.totalorder %s92, %s106
      %p108 = scmp.eq.s32.totalorder %s19, 0
      %p109 = por %p107, %p108
      %s110 = ssub.s32 %s13, %s20
      %p111 = scmp.eq.s32.totalorder %s110, 0
      %s113 = sadd.s32 %s112, 1
      %s114 = scalar_select %p111, %s112, %s113
      %p117 = pneg %p111
      %p118 = scmp.eq.s32.totalorder %s13, 3
      %p119 = por %p117, %p118
      %p120 = scmp.ne.s32.totalorder %s112, %s115
      %p121 = scmp.eq.s32.totalorder %s13, 0
      %p122 = por %p120, %p121
      %p123 = scmp.ne.s32.totalorder %s112, %s115
      %p124 = scmp.eq.s32.totalorder %s18, 3
      %p125 = por %p123, %p124
      %p126 = scmp.ne.s32.totalorder %s115, %s116
      %p127 = scmp.eq.s32.totalorder %s18, 0
      %p128 = por %p126, %p127
      %p129 = scmp.ne.s32.totalorder %s115, %s116
      %p130 = scmp.eq.s32.totalorder %s19, 3
      %p131 = por %p129, %p130
      %p133 = scmp.ne.s32.totalorder %s116, %s132
      %p134 = scmp.eq.s32.totalorder %s19, 0
      %p135 = por %p133, %p134
      %p136 = scmp.le.s32.totalorder 1, %s13
      %p137 = scmp.lt.s32.totalorder %s13, 5
      %p138 = pnand %p136, %p137
      %p139 = pneg %p138
      // Predicated region
      $region9: #{cl_head_forward.2} parent=5 // pred_check
        _
      $region10: #{cl_head_forward.2} parent=5 // pred_check_branch
        %141 = sbr.rel (%p138) target = $region12
      $region11: #{cl_head_forward.2} parent=5 // pred_region
        %s142 = ssub.s32 %s13, 1
        // Predicated region
        $region13: #{cl_head_forward.2} parent=11 // pred_check
          %p143 = pneg %p34
        $region14: #{cl_head_forward.2} parent=11 // pred_check_branch
          %145 = sbr.rel (%p143) target = $region16
        $region15: #{cl_head_forward.2} parent=11 // pred_region
          _
        $region16: #{cl_head_forward.2} parent=11 // pred_fallthru
          _
        // Predicated region
        $region17: #{cl_head_forward.2} parent=11 // pred_check
          %p146 = pneg %p81
        $region18: #{cl_head_forward.2} parent=11 // pred_check_branch
          %148 = sbr.rel (%p146) target = $region20
        $region19: #{cl_head_forward.2} parent=11 // pred_region
          _
        $region20: #{cl_head_forward.2} parent=11 // pred_fallthru
          _
        // Predicated region
        $region21: #{cl_head_forward.2} parent=11 // pred_check
          %p149 = pneg %p102
        $region22: #{cl_head_forward.2} parent=11 // pred_check_branch
          %151 = sbr.rel (%p149) target = $region24
        $region23: #{cl_head_forward.2} parent=11 // pred_region
          _
        $region24: #{cl_head_forward.2} parent=11 // pred_fallthru
          _
      $region12: #{cl_head_forward.2} parent=5 // pred_fallthru
        _
      %p152 = scmp.lt.s32.totalorder %s13, 4
      // Predicated region
      $region25: #{cl_head_forward.2} parent=5 // pred_check
        %p153 = pneg %p152
      $region26: #{cl_head_forward.2} parent=5 // pred_check_branch
        %155 = sbr.rel (%p153) target = $region28
      $region27: #{cl_head_forward.2} parent=5 // pred_region
        // Predicated region
        $region29: #{cl_head_forward.2} parent=27 // pred_check
          %p156 = pneg %p54
        $region30: #{cl_head_forward.2} parent=27 // pred_check_branch
          %158 = sbr.rel (%p156) target = $region32
        $region31: #{cl_head_forward.2} parent=27 // pred_region
          %s159 = sand.u32 %s44, 1
          %s160 = scalar_lea.sflag [#allocation3], %s159
          %s161 = sand.u32 %s44, 1
          %s162 = smul.addr %s161, 256
          %s163 = scalar_lea.vmem [#allocation2], %s162
          %165 = vsyncadd %s160, 0
          %s166 = smul.addr %s13, 4
          %s167 = scalar_lea.hbm %s1, %s166
          %s168 = sshll.u32 %s167, 4
          %s169 = int_to_ptr.hbm [resolvable:$true] %s168
          %s170 = sshll.u32 %s163, 4
          %s171 = int_to_ptr.vmem [resolvable:$true] %s170
          %176 = dma.hbm_to_vmem [thread:$0]  %s169, 4096, %s171, %s160, 256, 64, 4
        $region32: #{cl_head_forward.2} parent=27 // pred_fallthru
          _
      $region28: #{cl_head_forward.2} parent=5 // pred_fallthru
        _
      %p177 = scmp.le.s32.totalorder 1, %s13
      %p178 = scmp.lt.s32.totalorder %s13, 5
      %p179 = pnand %p177, %p178
      %p180 = pneg %p179
      // Predicated region
      $region33: #{cl_head_forward.2} parent=5 // pred_check
        _
      $region34: #{cl_head_forward.2} parent=5 // pred_check_branch
        %182 = sbr.rel (%p179) target = $region36
      $region35: #{cl_head_forward.2} parent=5 // pred_region
        %s183 = ssub.s32 %s13, 1
        %s184 = sand.u32 %s47, 1
        %s185 = scalar_lea.sflag [#allocation3], %s184
        %s186 = sand.u32 %s47, 1
        %s187 = smul.addr %s186, 256
        %s188 = scalar_lea.vmem [#allocation2], %s187
        // Predicated region
        $region37: #{cl_head_forward.2} parent=35 // pred_check
          %p189 = pneg %p60
        $region38: #{cl_head_forward.2} parent=35 // pred_check_branch
          %191 = sbr.rel (%p189) target = $region40
        $region39: #{cl_head_forward.2} parent=35 // pred_region
          %193 = dma.done %s185, 4096
        $region40: #{cl_head_forward.2} parent=35 // pred_fallthru
          _
        %p194 = pneg %p34
        %p195 = pneg %p31
        %s196 = sand.u32 %s47, 1
        %s197 = scalar_lea.sflag [#allocation3], %s196
        %s198 = sand.u32 %s47, 1
        %s199 = smul.addr %s198, 256
        %s200 = scalar_lea.vmem [#allocation2], %s199
        %p201 = pneg %p60
        %p202 = pneg %p57
        %p203 = pneg %p81
        %p204 = pneg %p78
        %p205 = pneg %p102
        %p206 = pneg %p99
        %p207 = pneg %p128
        %p208 = pneg %p125
        %p209 = scmp.lt.s32.totalorder %s18, 3
        %s210 = scalar_select %p209, %s18, 3
        %s211 = smul.addr %s210, 4
        %s212 = scalar_lea.vmem %s4, %s211
        %p213 = scmp.lt.s32.totalorder %s18, 3
        %s214 = scalar_select %p213, %s18, 3
        %s215 = smul.addr %s214, 4
        %s216 = scalar_lea.vmem %s4, %s215
        %v217 = vld [vmem:[%s0] sm:$0xff]
        %v218 = vld [vmem:[%s0 + $0x8] sm:$0xff]
        %v219 = vld [vmem:[%s188] sm:$0xf]
        %v220 = vld [vmem:[%s188 + $0x4] sm:$0xf]
        %v221 = vld [vmem:[%s188 + $0x8] sm:$0xf]
        %v222 = vld [vmem:[%s188 + $0xc] sm:$0xf]
        %v223 = vld [vmem:[%s188 + $0x10] sm:$0xf]
        %v224 = vld [vmem:[%s188 + $0x14] sm:$0xf]
        %v225 = vld [vmem:[%s188 + $0x18] sm:$0xf]
        %v226 = vld [vmem:[%s188 + $0x1c] sm:$0xf]
        %v227 = vld [vmem:[%s188 + $0x20] sm:$0xf]
        %v228 = vld [vmem:[%s188 + $0x24] sm:$0xf]
        %v229 = vld [vmem:[%s188 + $0x28] sm:$0xf]
        %v230 = vld [vmem:[%s188 + $0x2c] sm:$0xf]
        %v231 = vld [vmem:[%s188 + $0x30] sm:$0xf]
        %v232 = vld [vmem:[%s188 + $0x34] sm:$0xf]
        %v233 = vld [vmem:[%s188 + $0x38] sm:$0xf]
        %v234 = vld [vmem:[%s188 + $0x3c] sm:$0xf]
        %v235 = vld [vmem:[%s188 + $0x40] sm:$0xf]
        %v236 = vld [vmem:[%s188 + $0x44] sm:$0xf]
        %v237 = vld [vmem:[%s188 + $0x48] sm:$0xf]
        %v238 = vld [vmem:[%s188 + $0x4c] sm:$0xf]
        %v239 = vld [vmem:[%s188 + $0x50] sm:$0xf]
        %v240 = vld [vmem:[%s188 + $0x54] sm:$0xf]
        %v241 = vld [vmem:[%s188 + $0x58] sm:$0xf]
        %v242 = vld [vmem:[%s188 + $0x5c] sm:$0xf]
        %v243 = vld [vmem:[%s188 + $0x60] sm:$0xf]
        %v244 = vld [vmem:[%s188 + $0x64] sm:$0xf]
        %v245 = vld [vmem:[%s188 + $0x68] sm:$0xf]
        %v246 = vld [vmem:[%s188 + $0x6c] sm:$0xf]
        %v247 = vld [vmem:[%s188 + $0x70] sm:$0xf]
        %v248 = vld [vmem:[%s188 + $0x74] sm:$0xf]
        %v249 = vld [vmem:[%s188 + $0x78] sm:$0xf]
        %v250 = vld [vmem:[%s188 + $0x7c] sm:$0xf]
        %v251 = vld [vmem:[%s188 + $0x80] sm:$0xf]
        %v252 = vld [vmem:[%s188 + $0x84] sm:$0xf]
        %v253 = vld [vmem:[%s188 + $0x88] sm:$0xf]
        %v254 = vld [vmem:[%s188 + $0x8c] sm:$0xf]
        %v255 = vld [vmem:[%s188 + $0x90] sm:$0xf]
        %v256 = vld [vmem:[%s188 + $0x94] sm:$0xf]
        %v257 = vld [vmem:[%s188 + $0x98] sm:$0xf]
        %v258 = vld [vmem:[%s188 + $0x9c] sm:$0xf]
        %v259 = vld [vmem:[%s188 + $0xa0] sm:$0xf]
        %v260 = vld [vmem:[%s188 + $0xa4] sm:$0xf]
        %v261 = vld [vmem:[%s188 + $0xa8] sm:$0xf]
        %v262 = vld [vmem:[%s188 + $0xac] sm:$0xf]
        %v263 = vld [vmem:[%s188 + $0xb0] sm:$0xf]
        %v264 = vld [vmem:[%s188 + $0xb4] sm:$0xf]
        %v265 = vld [vmem:[%s188 + $0xb8] sm:$0xf]
        %v266 = vld [vmem:[%s188 + $0xbc] sm:$0xf]
        %v267 = vld [vmem:[%s188 + $0xc0] sm:$0xf]
        %v268 = vld [vmem:[%s188 + $0xc4] sm:$0xf]
        %v269 = vld [vmem:[%s188 + $0xc8] sm:$0xf]
        %v270 = vld [vmem:[%s188 + $0xcc] sm:$0xf]
        %v271 = vld [vmem:[%s188 + $0xd0] sm:$0xf]
        %v272 = vld [vmem:[%s188 + $0xd4] sm:$0xf]
        %v273 = vld [vmem:[%s188 + $0xd8] sm:$0xf]
        %v274 = vld [vmem:[%s188 + $0xdc] sm:$0xf]
        %v275 = vld [vmem:[%s188 + $0xe0] sm:$0xf]
        %v276 = vld [vmem:[%s188 + $0xe4] sm:$0xf]
        %v277 = vld [vmem:[%s188 + $0xe8] sm:$0xf]
        %v278 = vld [vmem:[%s188 + $0xec] sm:$0xf]
        %v279 = vld [vmem:[%s188 + $0xf0] sm:$0xf]
        %v280 = vld [vmem:[%s188 + $0xf4] sm:$0xf]
        %v281 = vld [vmem:[%s188 + $0xf8] sm:$0xf]
        %v282 = vld [vmem:[%s188 + $0xfc] sm:$0xf]
        %v285 = vunpack.c.l.b16 %v217
        %v286 = vunpack.c.h.b16 %v217
        %v287 = vunpack.c.l.b16 %v218
        %v288 = vunpack.c.h.b16 %v218
        %v289 = vpack.c.b16 %v285, %v285
        %v290 = vpack.c.b16 %v286, %v286
        %v291 = vpack.c.b16 %v287, %v287
        %v292 = vpack.c.b16 %v288, %v288
        %v361 = vunpack.c.l.b16 %v219
        %v362 = vunpack.c.l.b16 %v220
        %v363 = vunpack.c.l.b16 %v221
        %v364 = vunpack.c.l.b16 %v222
        %v365 = vunpack.c.l.b16 %v223
        %v366 = vunpack.c.l.b16 %v224
        %v367 = vunpack.c.l.b16 %v225
        %v368 = vunpack.c.l.b16 %v226
        %v369 = vunpack.c.l.b16 %v227
        %v370 = vunpack.c.l.b16 %v228
        %v371 = vunpack.c.l.b16 %v229
        %v372 = vunpack.c.l.b16 %v230
        %v373 = vunpack.c.l.b16 %v231
        %v374 = vunpack.c.l.b16 %v232
        %v375 = vunpack.c.l.b16 %v233
        %v376 = vunpack.c.l.b16 %v234
        %v377 = vunpack.c.l.b16 %v235
        %v378 = vunpack.c.l.b16 %v236
        %v379 = vunpack.c.l.b16 %v237
        %v380 = vunpack.c.l.b16 %v238
        %v381 = vunpack.c.l.b16 %v239
        %v382 = vunpack.c.l.b16 %v240
        %v383 = vunpack.c.l.b16 %v241
        %v384 = vunpack.c.l.b16 %v242
        %v385 = vunpack.c.l.b16 %v243
        %v386 = vunpack.c.l.b16 %v244
        %v387 = vunpack.c.l.b16 %v245
        %v388 = vunpack.c.l.b16 %v246
        %v389 = vunpack.c.l.b16 %v247
        %v390 = vunpack.c.l.b16 %v248
        %v391 = vunpack.c.l.b16 %v249
        %v392 = vunpack.c.l.b16 %v250
        %v393 = vunpack.c.l.b16 %v251
        %v394 = vunpack.c.l.b16 %v252
        %v395 = vunpack.c.l.b16 %v253
        %v396 = vunpack.c.l.b16 %v254
        %v397 = vunpack.c.l.b16 %v255
        %v398 = vunpack.c.l.b16 %v256
        %v399 = vunpack.c.l.b16 %v257
        %v400 = vunpack.c.l.b16 %v258
        %v401 = vunpack.c.l.b16 %v259
        %v402 = vunpack.c.l.b16 %v260
        %v403 = vunpack.c.l.b16 %v261
        %v404 = vunpack.c.l.b16 %v262
        %v405 = vunpack.c.l.b16 %v263
        %v406 = vunpack.c.l.b16 %v264
        %v407 = vunpack.c.l.b16 %v265
        %v408 = vunpack.c.l.b16 %v266
        %v409 = vunpack.c.l.b16 %v267
        %v410 = vunpack.c.l.b16 %v268
        %v411 = vunpack.c.l.b16 %v269
        %v412 = vunpack.c.l.b16 %v270
        %v413 = vunpack.c.l.b16 %v271
        %v414 = vunpack.c.l.b16 %v272
        %v415 = vunpack.c.l.b16 %v273
        %v416 = vunpack.c.l.b16 %v274
        %v417 = vunpack.c.l.b16 %v275
        %v418 = vunpack.c.l.b16 %v276
        %v419 = vunpack.c.l.b16 %v277
        %v420 = vunpack.c.l.b16 %v278
        %v421 = vunpack.c.l.b16 %v279
        %v422 = vunpack.c.l.b16 %v280
        %v423 = vunpack.c.l.b16 %v281
        %v424 = vunpack.c.l.b16 %v282
        %v425 = vpack.c.b16 %v362, %v361
        %v426 = vpack.c.b16 %v364, %v363
        %v427 = vpack.c.b16 %v366, %v365
        %v428 = vpack.c.b16 %v368, %v367
        %v429 = vpack.c.b16 %v370, %v369
        %v430 = vpack.c.b16 %v372, %v371
        %v431 = vpack.c.b16 %v374, %v373
        %v432 = vpack.c.b16 %v376, %v375
        %v433 = vpack.c.b16 %v378, %v377
        %v434 = vpack.c.b16 %v380, %v379
        %v435 = vpack.c.b16 %v382, %v381
        %v436 = vpack.c.b16 %v384, %v383
        %v437 = vpack.c.b16 %v386, %v385
        %v438 = vpack.c.b16 %v388, %v387
        %v439 = vpack.c.b16 %v390, %v389
        %v440 = vpack.c.b16 %v392, %v391
        %v441 = vpack.c.b16 %v394, %v393
        %v442 = vpack.c.b16 %v396, %v395
        %v443 = vpack.c.b16 %v398, %v397
        %v444 = vpack.c.b16 %v400, %v399
        %v445 = vpack.c.b16 %v402, %v401
        %v446 = vpack.c.b16 %v404, %v403
        %v447 = vpack.c.b16 %v406, %v405
        %v448 = vpack.c.b16 %v408, %v407
        %v449 = vpack.c.b16 %v410, %v409
        %v450 = vpack.c.b16 %v412, %v411
        %v451 = vpack.c.b16 %v414, %v413
        %v452 = vpack.c.b16 %v416, %v415
        %v453 = vpack.c.b16 %v418, %v417
        %v454 = vpack.c.b16 %v420, %v419
        %v455 = vpack.c.b16 %v422, %v421
        %v456 = vpack.c.b16 %v424, %v423
        %489 = vmatpush.bf16.msra.mxu0 %v432
        %490 = vmatpush.bf16.msra.mxu0 %v431
        %491 = vmatpush.bf16.msra.mxu0 %v430
        %492 = vmatpush.bf16.msra.mxu0 %v429
        %493 = vmatpush.bf16.msra.mxu0 %v428
        %494 = vmatpush.bf16.msra.mxu0 %v427
        %495 = vmatpush.bf16.msra.mxu0 %v426
        %496 = vmatpush.bf16.msra.mxu0 %v425
        %497 = vmatmul.bf16.gmra.mxu0 %v289
        %v498 = vpop.f32.mrf.mxu0
        %v499 = vadd.f32 0.0, %v498
        %v500 = vpop.f32.mrf.mxu0
        %501 = vdwg.mxu0
        %502 = vmatpush.bf16.msra.mxu0 %v440
        %503 = vmatpush.bf16.msra.mxu0 %v439
        %504 = vmatpush.bf16.msra.mxu0 %v438
        %505 = vmatpush.bf16.msra.mxu0 %v437
        %506 = vmatpush.bf16.msra.mxu0 %v436
        %507 = vmatpush.bf16.msra.mxu0 %v435
        %508 = vmatpush.bf16.msra.mxu0 %v434
        %509 = vmatpush.bf16.msra.mxu0 %v433
        %510 = vmatmul.bf16.gmra.mxu0 %v290
        %v511 = vpop.f32.mrf.mxu0
        %v512 = vadd.f32 %v499, %v511
        %v513 = vpop.f32.mrf.mxu0
        %514 = vdwg.mxu0
        %515 = vmatpush.bf16.msra.mxu0 %v448
        %516 = vmatpush.bf16.msra.mxu0 %v447
        %517 = vmatpush.bf16.msra.mxu0 %v446
        %518 = vmatpush.bf16.msra.mxu0 %v445
        %519 = vmatpush.bf16.msra.mxu0 %v444
        %520 = vmatpush.bf16.msra.mxu0 %v443
        %521 = vmatpush.bf16.msra.mxu0 %v442
        %522 = vmatpush.bf16.msra.mxu0 %v441
        %523 = vmatmul.bf16.gmra.mxu0 %v291
        %v524 = vpop.f32.mrf.mxu0
        %v525 = vadd.f32 %v512, %v524
        %v526 = vpop.f32.mrf.mxu0
        %527 = vdwg.mxu0
        %528 = vmatpush.bf16.msra.mxu0 %v456
        %529 = vmatpush.bf16.msra.mxu0 %v455
        %530 = vmatpush.bf16.msra.mxu0 %v454
        %531 = vmatpush.bf16.msra.mxu0 %v453
        %532 = vmatpush.bf16.msra.mxu0 %v452
        %533 = vmatpush.bf16.msra.mxu0 %v451
        %534 = vmatpush.bf16.msra.mxu0 %v450
        %535 = vmatpush.bf16.msra.mxu0 %v449
        %536 = vmatmul.bf16.gmra.mxu0 %v292
        %v537 = vpop.f32.mrf.mxu0
        %v538 = vadd.f32 %v525, %v537
        %v539 = vpop.f32.mrf.mxu0
        %540 = vdwg.mxu0
        %s541 = scalar_lea.vmem %s2, %s18
        %v542 = vld [vmem:[%s541] sm:$0x1]
        %s543 = scalar_lea.vmem %s3, %s18
        %v544 = vld [vmem:[%s543] sm:$0x1]
        %v545 = vrot.slane %v538, 4
        %v546 = vadd.f32 %v538, %v545
        %v547 = vrot.slane %v546, 2
        %v548 = vadd.f32 %v546, %v547
        %v549 = vrot.slane %v548, 1
        %v550 = vadd.f32 %v548, %v549
        %v551 = vmul.f32 %v550, 0.125
        %v552 = vsub.f32 %v538, %v551
        %v553 = vmul.f32 %v552, %v552
        %v554 = vrot.slane %v553, 4
        %v555 = vadd.f32 %v553, %v554
        %v556 = vrot.slane %v555, 2
        %v557 = vadd.f32 %v555, %v556
        %v558 = vrot.slane %v557, 1
        %v559 = vadd.f32 %v557, %v558
        %v560 = vmul.f32 %v559, 0.125
        %v561 = vadd.f32 %v560, 1e-05
        %v562 = vrsqrt.pop %v561
        %v563 = vmul.f32 %v562, %v561
        %v564 = vmul.f32 %v563, %v562
        %v565 = vmul.f32 0.5, %v564
        %v566 = vsub.f32 1.5, %v565
        %v567 = vmul.f32 %v562, %v566
        %vm568 = vweird.f32 %v561
        %vm569 = vweird.f32 %v562
        %vm570 = vmor %vm568, %vm569
        %v571 = vsel %vm570, %v562, %v567
        %v572 = vmul.f32 %v542, %v571
        %v574 = vperm.slane %v572, 0
        %v576 = vmul.f32 %v552, %v574
        %v578 = vperm.slane %v544, 0
        %v580 = vadd.f32 %v576, %v578
        %v581 = vmax.f32 %v580, 0.0
        %v582 = vpack.c.bf16 %v581, %v581
        %583 = vst [vmem:[%s216] sm:$0xf] %v582
        %p584 = scmp.lt.s32.totalorder %s18, 3
        %s585 = scalar_select %p584, %s18, 3
        %s586 = smul.addr %s585, 4
        %s587 = scalar_lea.vmem %s4, %s586
        // Predicated region
        $region41: #{cl_head_forward.2} parent=35 // pred_check
          %p588 = pneg %p125
        $region42: #{cl_head_forward.2} parent=35 // pred_check_branch
          %590 = sbr.rel (%p588) target = $region44
        $region43: #{cl_head_forward.2} parent=35 // pred_region
          _
        $region44: #{cl_head_forward.2} parent=35 // pred_fallthru
          _
      $region36: #{cl_head_forward.2} parent=5 // pred_fallthru
        _
      %p591 = scmp.le.s32.totalorder 2, %s13
      // Predicated region
      $region45: #{cl_head_forward.2} parent=5 // pred_check
        %p592 = pneg %p591
      $region46: #{cl_head_forward.2} parent=5 // pred_check_branch
        %594 = sbr.rel (%p592) target = $region48
      $region47: #{cl_head_forward.2} parent=5 // pred_region
        %s595 = ssub.s32 %s13, 2
        // Predicated region
        $region49: #{cl_head_forward.2} parent=47 // pred_check
          %p596 = pneg %p131
        $region50: #{cl_head_forward.2} parent=47 // pred_check_branch
          %598 = sbr.rel (%p596) target = $region52
        $region51: #{cl_head_forward.2} parent=47 // pred_region
          %p599 = scmp.lt.s32.totalorder %s19, 3
          %s600 = scalar_select %p599, %s19, 3
          %s601 = smul.addr %s600, 4
          %s602 = scalar_lea.vmem %s4, %s601
        $region52: #{cl_head_forward.2} parent=47 // pred_fallthru
          _
      $region48: #{cl_head_forward.2} parent=5 // pred_fallthru
        _
    $region6: #{cl_head_forward.2} parent=1 // loop_footer
      %s17 = sadd.s32 1, %s13
    $region7: #{cl_head_forward.2} parent=1 // loop_footer_branch
      %12 = sbr.rel target = $region3
    $region8: #{cl_head_forward.2} parent=1 // loop_exit
      _
    %603 = vsyncpa [#allocation3], 1
    %s604 = scalar_lea.sflag [#allocation3], 1
    %605 = vsyncpa %s604, 1

</llo_original>
